<compile_context>
chip_gen: v7x
topology: tpu7x:2x2x1
jax: 0.10.0
libtpu: 0.0.40
codegen_flags: <defaults>
</compile_context>

<pallas_src>
import functools

import jax
import jax.numpy as jnp
from jax import lax
from jax.experimental import pallas as pl
from jax.experimental.pallas import tpu as pltpu


_INV_SQRT2 = 0.7071067811865476
_SQRT_2_OVER_PI = 0.7978845608028654


def _gelu_exact(x):
    # exact GELU: 0.5 * x * (1 + erf(x / sqrt(2)))  (torch.nn.GELU default)
    return 0.5 * x * (1.0 + lax.erf(x * _INV_SQRT2))


def _gelu_tanh(x):
    # tanh approximation: runs on the EUP (an otherwise idle bundle slot)
    # instead of the saturating VPU; ~1e-3 drift vs. the exact form.
    return 0.5 * x * (1.0 + jnp.tanh(_SQRT_2_OVER_PI * (x + 0.044715 * x * x * x)))


def _layernorm(x, g, b, eps=1e-5):
    # centered two-pass form (matches torch.nn.LayerNorm numerics).
    mu = jnp.mean(x, axis=-1, keepdims=True)
    xc = x - mu
    var = jnp.mean(xc * xc, axis=-1, keepdims=True)
    return xc * lax.rsqrt(var + eps) * g + b


def mlp_kernel(x_ref, w0_ref, w1_ref, wr_ref, w2_ref, vec_ref, o_ref, *,
               use_tanh_gelu):
    gelu = _gelu_tanh if use_tanh_gelu else _gelu_exact
    bf16 = jnp.bfloat16
    H = w0_ref.shape[1]
    H2 = w1_ref.shape[1]
    H4 = w2_ref.shape[1]

    # Unpack the (16, >=128) f32 slab of small per-feature vectors.
    vec = vec_ref[...]
    b0, g1, be1 = vec[0:1, :H], vec[1:2, :H], vec[2:3, :H]
    b1, br = vec[3:4, :H2], vec[4:5, :H2]
    g2, be2 = vec[5:6, :H2], vec[6:7, :H2]
    b2 = vec[7:8, :H4]
    b3 = vec[7:8, H4:H4 + 1]                 # (1, 1) scalar bias, spare column
    w3b = vec[8:16, :H4].astype(bf16)        # final weight row pre-broadcast to 8 sublanes

    x = x_ref[...]                           # (tm, D) f32 (last tile may hold garbage
                                             #  rows beyond N; they never mix across rows)

    # input_proj: Linear -> GELU -> Dropout(identity at inference)
    h = gelu(jnp.dot(x.astype(bf16), w0_ref[...],
                     preferred_element_type=jnp.float32) + b0)

    # layers[0]: LayerNorm -> Linear -> GELU -> Dropout(identity)
    h = _layernorm(h, g1, be1)
    h = gelu(jnp.dot(h.astype(bf16), w1_ref[...],
                     preferred_element_type=jnp.float32) + b1)

    # ResidualBlock: x + Linear(x)   (single bf16 cast of h, reused)
    hb = h.astype(bf16)
    h = h + (jnp.dot(hb, wr_ref[...], preferred_element_type=jnp.float32) + br)

    # layers[-1]: LayerNorm -> Linear -> GELU -> Dropout(identity) -> Linear(->1)
    h = _layernorm(h, g2, be2)
    h = gelu(jnp.dot(h.astype(bf16), w2_ref[...],
                     preferred_element_type=jnp.float32) + b2)

    # Final Linear(H4 -> 1) as an NT matmul: (8, H4) @ (tm, H4)^T -> (8, tm).
    # Only row 0 is meaningful; the result is lane-dense -> unmasked stores.
    out8 = lax.dot_general(w3b, h.astype(bf16),
                           dimension_numbers=(((1,), (1,)), ((), ())),
                           preferred_element_type=jnp.float32)
    o_ref[...] = (out8[0:1, :] + b3).astype(o_ref.dtype)


def enhanced_distance_predictor(x, params, *, tm=1024, use_tanh_gelu=False):
    """x: (N, node_dim*2) f32 -> (N,) f32.

    tm: batch tile (multiple of 128), clamped to the 128-rounded batch.
    v5e/v6e (single TC): a single fat step (tm >= N) is best; on v7x pick tm
    so cdiv(N, tm) is even and >= 2 so both TensorCores get grid steps.
    """
    (w0, b0, g1, be1, w1, b1, wr, br, g2, be2, w2, b2, w3, b3) = params
    N, D = x.shape
    H, H2, H4 = w0.shape[1], w1.shape[1], w2.shape[1]

    n_pad128 = ((N + 127) // 128) * 128
    tm = max(128, (int(tm) // 128) * 128)
    tm = min(tm, n_pad128)
    num_tiles = pl.cdiv(N, tm)        # last block may be partial; Pallas clips its DMA

    # Pack the small per-feature vectors (+ b3 scalar + pre-broadcast w3 row)
    # into one (16, >=128) f32 slab: a single operand / DMA window.
    vec_w = max(128, ((max(H, H2, H4 + 1) + 127) // 128) * 128)
    vec = jnp.zeros((16, vec_w), jnp.float32)
    vec = vec.at[0, :H].set(b0.reshape(-1))
    vec = vec.at[1, :H].set(g1.reshape(-1))
    vec = vec.at[2, :H].set(be1.reshape(-1))
    vec = vec.at[3, :H2].set(b1.reshape(-1))
    vec = vec.at[4, :H2].set(br.reshape(-1))
    vec = vec.at[5, :H2].set(g2.reshape(-1))
    vec = vec.at[6, :H2].set(be2.reshape(-1))
    vec = vec.at[7, :H4].set(b2.reshape(-1))
    vec = vec.at[7, H4].set(b3.reshape(-1)[0])
    vec = vec.at[8:16, :H4].set(jnp.broadcast_to(w3.reshape(1, H4), (8, H4)))

    # bf16 MXU operands (accumulation stays f32 inside the kernel).
    w0b, w1b, wrb, w2b = (w.astype(jnp.bfloat16) for w in (w0, w1, wr, w2))

    flops = 2 * N * (D * H + H * H2 + H2 * H2 + H2 * H4 + H4)
    transcendentals = N * (H + H2 + H4 + 2)
    bytes_accessed = (N * D * 4 + N * 4
                      + 2 * (D * H + H * H2 + H2 * H2 + H2 * H4)
                      + 16 * vec_w * 4)

    cparams = pltpu.CompilerParams(
        dimension_semantics=("parallel",),
        # Only needed when sweeping very large tm (v5e's 16 MiB scoped default).
        vmem_limit_bytes=(64 * 1024 * 1024 if tm >= 2048 else None),
    )

    out = pl.pallas_call(
        functools.partial(mlp_kernel, use_tanh_gelu=use_tanh_gelu),
        out_shape=jax.ShapeDtypeStruct((1, N), jnp.float32),
        grid=(num_tiles,),
        in_specs=[
            pl.BlockSpec((tm, D), lambda i: (i, 0)),       # x tile (streams)
            pl.BlockSpec((D, H), lambda i: (0, 0)),        # w0 (grid-invariant)
            pl.BlockSpec((H, H2), lambda i: (0, 0)),       # w1
            pl.BlockSpec((H2, H2), lambda i: (0, 0)),      # wr (residual)
            pl.BlockSpec((H2, H4), lambda i: (0, 0)),      # w2
            pl.BlockSpec((16, vec_w), lambda i: (0, 0)),   # packed vectors / w3 / biases
        ],
        out_specs=pl.BlockSpec((1, tm), lambda i: (0, i)),  # lane-dense output row
        compiler_params=cparams,
        cost_estimate=pl.CostEstimate(flops=flops,
                                      transcendentals=transcendentals,
                                      bytes_accessed=bytes_accessed),
    )(x, w0b, w1b, wrb, w2b, vec)

    # .squeeze(-1) of the PyTorch forward.
    return out[0]


def init_params(key, node_dim, hidden_dim):
    """Deterministic synthetic parameters (shapes match the torch module)."""
    input_dim = node_dim * 2
    h2, h4 = hidden_dim // 2, hidden_dim // 4
    ks = jax.random.split(key, 8)

    def lin(k, fan_in, fan_out):
        kw, kb = jax.random.split(k)
        bound = 1.0 / jnp.sqrt(fan_in)
        w = jax.random.uniform(kw, (fan_in, fan_out), jnp.float32, -bound, bound)
        b = jax.random.uniform(kb, (1, fan_out), jnp.float32, -bound, bound)
        return w, b

    w0, b0 = lin(ks[0], input_dim, hidden_dim)   # input_proj Linear
    g1 = jnp.ones((1, hidden_dim), jnp.float32)  # LayerNorm(hidden_dim)
    be1 = jnp.zeros((1, hidden_dim), jnp.float32)
    w1, b1 = lin(ks[1], hidden_dim, h2)          # Linear(hidden, hidden//2)
    wr, br = lin(ks[2], h2, h2)                  # ResidualBlock Linear
    g2 = jnp.ones((1, h2), jnp.float32)          # LayerNorm(hidden//2)
    be2 = jnp.zeros((1, h2), jnp.float32)
    w2, b2 = lin(ks[3], h2, h4)                  # Linear(hidden//2, hidden//4)
    w3, b3 = lin(ks[4], h4, 1)                   # Linear(hidden//4, 1)

    return [w0, b0, g1, be1, w1, b1, wr, br, g2, be2, w2, b2, w3, b3]


def reference_forward(x, params, matmul_dtype=jnp.float32, use_tanh_gelu=False):
    """Pure-JAX reference; matmul_dtype=bf16 mirrors the kernel's MXU casts."""
    (w0, b0, g1, be1, w1, b1, wr, br, g2, be2, w2, b2, w3, b3) = params
    gelu = _gelu_tanh if use_tanh_gelu else _gelu_exact
    dt = matmul_dtype

    def mm(a, w):
        return jnp.dot(a.astype(dt), w.astype(dt),
                       preferred_element_type=jnp.float32)

    h = gelu(mm(x, w0) + b0)
    h = _layernorm(h, g1, be1)
    h = gelu(mm(h, w1) + b1)
    h = h + (mm(h, wr) + br)
    h = _layernorm(h, g2, be2)
    h = gelu(mm(h, w2) + b2)
    out = mm(h, w3) + b3
    return out[:, 0]


if __name__ == "__main__":
    node_dim = 16
    hidden_dim = 64
    batch = 256  # number of concatenated node-feature pairs

    key = jax.random.PRNGKey(0)
    kx, kp = jax.random.split(key)
    x = jax.random.normal(kx, (batch, node_dim * 2), jnp.float32)
    params = init_params(kp, node_dim, hidden_dim)

    # Case 1: exact erf GELU (torch.nn.GELU() semantics).  tm=128 -> 2
    # "parallel" steps so both v7x TensorCores get work; on v5e/v6e a single
    # tm=256 step is equally valid — sweep tm there.
    y = jax.block_until_ready(enhanced_distance_predictor(x, params, tm=128))
    assert y.shape == (batch,)

    # Tight check vs. a reference that uses the same bf16 MXU operands.
    y_bf = reference_forward(x, params, jnp.bfloat16)
    assert jnp.allclose(y, y_bf, atol=5e-3, rtol=5e-3), \
        float(jnp.max(jnp.abs(y - y_bf)))
    # Coarse sanity check of the bf16-matmul drift vs. the full-f32 math.
    y_f32 = reference_forward(x, params, jnp.float32)
    assert jnp.allclose(y, y_f32, atol=1e-1, rtol=1e-1), \
        float(jnp.max(jnp.abs(y - y_f32)))

    # Case 2: ragged batch (exercises the no-pad partial last block) with the
    # EUP tanh-approx GELU flag; default tm=1024 clamps to one fat step.
    n2 = 300
    x2 = jax.random.normal(jax.random.PRNGKey(1), (n2, node_dim * 2), jnp.float32)
    y2 = jax.block_until_ready(
        enhanced_distance_predictor(x2, params, use_tanh_gelu=True))
    assert y2.shape == (n2,)
    y2_ref = reference_forward(x2, params, jnp.bfloat16, use_tanh_gelu=True)
    assert jnp.allclose(y2, y2_ref, atol=5e-3, rtol=5e-3), \
        float(jnp.max(jnp.abs(y2 - y2_ref)))

    print("KERNEL_OK")
</pallas_src>

<mosaic_0001>
module attributes {stable_mosaic.version = 11 : i64} {
  func.func @mlp_kernel(%arg0: i32, %arg1: memref<128x32xf32, #tpu.memory_space<vmem>>, %arg2: memref<32x64xbf16, #tpu.memory_space<vmem>>, %arg3: memref<64x32xbf16, #tpu.memory_space<vmem>>, %arg4: memref<32x32xbf16, #tpu.memory_space<vmem>>, %arg5: memref<32x16xbf16, #tpu.memory_space<vmem>>, %arg6: memref<16x128xf32, #tpu.memory_space<vmem>>, %arg7: memref<1x128xf32, #tpu.memory_space<vmem>>) attributes {dimension_semantics = [#tpu.dimension_semantics<parallel>], iteration_bounds = array<i64: 2>, scalar_prefetch = 0 : i64, scratch_operands = 0 : i64, tpu.core_type = #tpu.core_type<tc>, window_params = [{transform_indices = @transform_0, window_bounds = array<i64: 128, 32>}, {pipeline_mode = #tpu.pipeline_mode<synchronous>, transform_indices = @transform_1, window_bounds = array<i64: 32, 64>}, {pipeline_mode = #tpu.pipeline_mode<synchronous>, transform_indices = @transform_2, window_bounds = array<i64: 64, 32>}, {pipeline_mode = #tpu.pipeline_mode<synchronous>, transform_indices = @transform_3, window_bounds = array<i64: 32, 32>}, {pipeline_mode = #tpu.pipeline_mode<synchronous>, transform_indices = @transform_4, window_bounds = array<i64: 32, 16>}, {pipeline_mode = #tpu.pipeline_mode<synchronous>, transform_indices = @transform_5, window_bounds = array<i64: 16, 128>}, {transform_indices = @transform_6, window_bounds = array<i64: 1, 128>}]} {
    %c0 = arith.constant 0 : index
    %c0_0 = arith.constant 0 : index
    %0 = vector.load %arg6[%c0, %c0_0] : memref<16x128xf32, #tpu.memory_space<vmem>>, vector<16x128xf32>
    %1 = vector.extract_strided_slice %0 {offsets = [0, 0], sizes = [1, 64], strides = [1, 1]} : vector<16x128xf32> to vector<1x64xf32>
    %2 = vector.extract_strided_slice %0 {offsets = [1, 0], sizes = [1, 64], strides = [1, 1]} : vector<16x128xf32> to vector<1x64xf32>
    %3 = vector.extract_strided_slice %0 {offsets = [2, 0], sizes = [1, 64], strides = [1, 1]} : vector<16x128xf32> to vector<1x64xf32>
    %4 = vector.extract_strided_slice %0 {offsets = [3, 0], sizes = [1, 32], strides = [1, 1]} : vector<16x128xf32> to vector<1x32xf32>
    %5 = vector.extract_strided_slice %0 {offsets = [4, 0], sizes = [1, 32], strides = [1, 1]} : vector<16x128xf32> to vector<1x32xf32>
    %6 = vector.extract_strided_slice %0 {offsets = [5, 0], sizes = [1, 32], strides = [1, 1]} : vector<16x128xf32> to vector<1x32xf32>
    %7 = vector.extract_strided_slice %0 {offsets = [6, 0], sizes = [1, 32], strides = [1, 1]} : vector<16x128xf32> to vector<1x32xf32>
    %8 = vector.extract_strided_slice %0 {offsets = [7, 0], sizes = [1, 16], strides = [1, 1]} : vector<16x128xf32> to vector<1x16xf32>
    %9 = vector.extract_strided_slice %0 {offsets = [7, 16], sizes = [1, 1], strides = [1, 1]} : vector<16x128xf32> to vector<1x1xf32>
    %10 = vector.extract_strided_slice %0 {offsets = [8, 0], sizes = [8, 16], strides = [1, 1]} : vector<16x128xf32> to vector<8x16xf32>
    %11 = arith.truncf %10 : vector<8x16xf32> to vector<8x16xbf16>
    %c0_1 = arith.constant 0 : index
    %c0_2 = arith.constant 0 : index
    %12 = vector.load %arg1[%c0_1, %c0_2] : memref<128x32xf32, #tpu.memory_space<vmem>>, vector<128x32xf32>
    %13 = arith.truncf %12 : vector<128x32xf32> to vector<128x32xbf16>
    %c0_3 = arith.constant 0 : index
    %c0_4 = arith.constant 0 : index
    %14 = vector.load %arg2[%c0_3, %c0_4] : memref<32x64xbf16, #tpu.memory_space<vmem>>, vector<32x64xbf16>
    %cst = arith.constant dense<0.000000e+00> : vector<128x64xf32>
    %15 = tpu.matmul %13, %14, %cst {dimension_numbers = #tpu.dot_dimension_numbers<[1], [0], [0], [1], [0, 0, 1, 1], [], []>} : vector<128x32xbf16>, vector<32x64xbf16>, vector<128x64xf32> -> vector<128x64xf32>
    %16 = vector.broadcast %1 : vector<1x64xf32> to vector<128x64xf32>
    %17 = arith.addf %15, %16 : vector<128x64xf32>
    %cst_5 = arith.constant 5.000000e-01 : f32
    %18 = vector.broadcast %cst_5 : f32 to vector<128x64xf32>
    %19 = arith.mulf %18, %17 : vector<128x64xf32>
    %cst_6 = arith.constant 0.707106769 : f32
    %20 = vector.broadcast %cst_6 : f32 to vector<128x64xf32>
    %21 = arith.mulf %17, %20 : vector<128x64xf32>
    %22 = math.erf %21 : vector<128x64xf32>
    %cst_7 = arith.constant 1.000000e+00 : f32
    %23 = vector.broadcast %cst_7 : f32 to vector<128x64xf32>
    %24 = arith.addf %23, %22 : vector<128x64xf32>
    %25 = arith.mulf %19, %24 : vector<128x64xf32>
    %cst_8 = arith.constant dense<0.000000e+00> : vector<128xf32>
    %26 = vector.multi_reduction <add>, %25, %cst_8 [1] : vector<128x64xf32> to vector<128xf32>
    %27 = vector.shape_cast %26 : vector<128xf32> to vector<128x1xf32>
    %cst_9 = arith.constant 6.400000e+01 : f32
    %28 = vector.broadcast %cst_9 : f32 to vector<128x1xf32>
    %29 = arith.divf %27, %28 : vector<128x1xf32>
    %30 = vector.broadcast %29 : vector<128x1xf32> to vector<128x64xf32>
    %31 = arith.subf %25, %30 : vector<128x64xf32>
    %32 = arith.mulf %31, %31 : vector<128x64xf32>
    %cst_10 = arith.constant dense<0.000000e+00> : vector<128xf32>
    %33 = vector.multi_reduction <add>, %32, %cst_10 [1] : vector<128x64xf32> to vector<128xf32>
    %34 = vector.shape_cast %33 : vector<128xf32> to vector<128x1xf32>
    %cst_11 = arith.constant 6.400000e+01 : f32
    %35 = vector.broadcast %cst_11 : f32 to vector<128x1xf32>
    %36 = arith.divf %34, %35 : vector<128x1xf32>
    %cst_12 = arith.constant 9.99999974E-6 : f32
    %37 = vector.broadcast %cst_12 : f32 to vector<128x1xf32>
    %38 = arith.addf %36, %37 : vector<128x1xf32>
    %39 = math.rsqrt %38 : vector<128x1xf32>
    %40 = vector.broadcast %39 : vector<128x1xf32> to vector<128x64xf32>
    %41 = arith.mulf %31, %40 : vector<128x64xf32>
    %42 = vector.broadcast %2 : vector<1x64xf32> to vector<128x64xf32>
    %43 = arith.mulf %41, %42 : vector<128x64xf32>
    %44 = vector.broadcast %3 : vector<1x64xf32> to vector<128x64xf32>
    %45 = arith.addf %43, %44 : vector<128x64xf32>
    %46 = arith.truncf %45 : vector<128x64xf32> to vector<128x64xbf16>
    %c0_13 = arith.constant 0 : index
    %c0_14 = arith.constant 0 : index
    %47 = vector.load %arg3[%c0_13, %c0_14] : memref<64x32xbf16, #tpu.memory_space<vmem>>, vector<64x32xbf16>
    %cst_15 = arith.constant dense<0.000000e+00> : vector<128x32xf32>
    %48 = tpu.matmul %46, %47, %cst_15 {dimension_numbers = #tpu.dot_dimension_numbers<[1], [0], [0], [1], [0, 0, 1, 1], [], []>} : vector<128x64xbf16>, vector<64x32xbf16>, vector<128x32xf32> -> vector<128x32xf32>
    %49 = vector.broadcast %4 : vector<1x32xf32> to vector<128x32xf32>
    %50 = arith.addf %48, %49 : vector<128x32xf32>
    %cst_16 = arith.constant 5.000000e-01 : f32
    %51 = vector.broadcast %cst_16 : f32 to vector<128x32xf32>
    %52 = arith.mulf %51, %50 : vector<128x32xf32>
    %cst_17 = arith.constant 0.707106769 : f32
    %53 = vector.broadcast %cst_17 : f32 to vector<128x32xf32>
    %54 = arith.mulf %50, %53 : vector<128x32xf32>
    %55 = math.erf %54 : vector<128x32xf32>
    %cst_18 = arith.constant 1.000000e+00 : f32
    %56 = vector.broadcast %cst_18 : f32 to vector<128x32xf32>
    %57 = arith.addf %56, %55 : vector<128x32xf32>
    %58 = arith.mulf %52, %57 : vector<128x32xf32>
    %59 = arith.truncf %58 : vector<128x32xf32> to vector<128x32xbf16>
    %c0_19 = arith.constant 0 : index
    %c0_20 = arith.constant 0 : index
    %60 = vector.load %arg4[%c0_19, %c0_20] : memref<32x32xbf16, #tpu.memory_space<vmem>>, vector<32x32xbf16>
    %cst_21 = arith.constant dense<0.000000e+00> : vector<128x32xf32>
    %61 = tpu.matmul %59, %60, %cst_21 {dimension_numbers = #tpu.dot_dimension_numbers<[1], [0], [0], [1], [0, 0, 1, 1], [], []>} : vector<128x32xbf16>, vector<32x32xbf16>, vector<128x32xf32> -> vector<128x32xf32>
    %62 = vector.broadcast %5 : vector<1x32xf32> to vector<128x32xf32>
    %63 = arith.addf %61, %62 : vector<128x32xf32>
    %64 = arith.addf %58, %63 : vector<128x32xf32>
    %cst_22 = arith.constant dense<0.000000e+00> : vector<128xf32>
    %65 = vector.multi_reduction <add>, %64, %cst_22 [1] : vector<128x32xf32> to vector<128xf32>
    %66 = vector.shape_cast %65 : vector<128xf32> to vector<128x1xf32>
    %cst_23 = arith.constant 3.200000e+01 : f32
    %67 = vector.broadcast %cst_23 : f32 to vector<128x1xf32>
    %68 = arith.divf %66, %67 : vector<128x1xf32>
    %69 = vector.broadcast %68 : vector<128x1xf32> to vector<128x32xf32>
    %70 = arith.subf %64, %69 : vector<128x32xf32>
    %71 = arith.mulf %70, %70 : vector<128x32xf32>
    %cst_24 = arith.constant dense<0.000000e+00> : vector<128xf32>
    %72 = vector.multi_reduction <add>, %71, %cst_24 [1] : vector<128x32xf32> to vector<128xf32>
    %73 = vector.shape_cast %72 : vector<128xf32> to vector<128x1xf32>
    %cst_25 = arith.constant 3.200000e+01 : f32
    %74 = vector.broadcast %cst_25 : f32 to vector<128x1xf32>
    %75 = arith.divf %73, %74 : vector<128x1xf32>
    %cst_26 = arith.constant 9.99999974E-6 : f32
    %76 = vector.broadcast %cst_26 : f32 to vector<128x1xf32>
    %77 = arith.addf %75, %76 : vector<128x1xf32>
    %78 = math.rsqrt %77 : vector<128x1xf32>
    %79 = vector.broadcast %78 : vector<128x1xf32> to vector<128x32xf32>
    %80 = arith.mulf %70, %79 : vector<128x32xf32>
    %81 = vector.broadcast %6 : vector<1x32xf32> to vector<128x32xf32>
    %82 = arith.mulf %80, %81 : vector<128x32xf32>
    %83 = vector.broadcast %7 : vector<1x32xf32> to vector<128x32xf32>
    %84 = arith.addf %82, %83 : vector<128x32xf32>
    %85 = arith.truncf %84 : vector<128x32xf32> to vector<128x32xbf16>
    %c0_27 = arith.constant 0 : index
    %c0_28 = arith.constant 0 : index
    %86 = vector.load %arg5[%c0_27, %c0_28] : memref<32x16xbf16, #tpu.memory_space<vmem>>, vector<32x16xbf16>
    %cst_29 = arith.constant dense<0.000000e+00> : vector<128x16xf32>
    %87 = tpu.matmul %85, %86, %cst_29 {dimension_numbers = #tpu.dot_dimension_numbers<[1], [0], [0], [1], [0, 0, 1, 1], [], []>} : vector<128x32xbf16>, vector<32x16xbf16>, vector<128x16xf32> -> vector<128x16xf32>
    %88 = vector.broadcast %8 : vector<1x16xf32> to vector<128x16xf32>
    %89 = arith.addf %87, %88 : vector<128x16xf32>
    %cst_30 = arith.constant 5.000000e-01 : f32
    %90 = vector.broadcast %cst_30 : f32 to vector<128x16xf32>
    %91 = arith.mulf %90, %89 : vector<128x16xf32>
    %cst_31 = arith.constant 0.707106769 : f32
    %92 = vector.broadcast %cst_31 : f32 to vector<128x16xf32>
    %93 = arith.mulf %89, %92 : vector<128x16xf32>
    %94 = math.erf %93 : vector<128x16xf32>
    %cst_32 = arith.constant 1.000000e+00 : f32
    %95 = vector.broadcast %cst_32 : f32 to vector<128x16xf32>
    %96 = arith.addf %95, %94 : vector<128x16xf32>
    %97 = arith.mulf %91, %96 : vector<128x16xf32>
    %98 = arith.truncf %97 : vector<128x16xf32> to vector<128x16xbf16>
    %cst_33 = arith.constant dense<0.000000e+00> : vector<8x128xf32>
    %99 = tpu.matmul %11, %98, %cst_33 {dimension_numbers = #tpu.dot_dimension_numbers<[1], [1], [0], [0], [0, 0, 1, 0], [], []>} : vector<8x16xbf16>, vector<128x16xbf16>, vector<8x128xf32> -> vector<8x128xf32>
    %100 = vector.extract_strided_slice %99 {offsets = [0, 0], sizes = [1, 128], strides = [1, 1]} : vector<8x128xf32> to vector<1x128xf32>
    %101 = vector.broadcast %9 : vector<1x1xf32> to vector<1x128xf32>
    %102 = arith.addf %100, %101 : vector<1x128xf32>
    %c0_34 = arith.constant 0 : index
    %c0_35 = arith.constant 0 : index
    %103 = vector.load %arg7[%c0_34, %c0_35] : memref<1x128xf32, #tpu.memory_space<vmem>>, vector<1x128xf32>
    tpu.vector_store %arg7[%c0_34, %c0_35], %102 {strides = array<i32>} : memref<1x128xf32, #tpu.memory_space<vmem>>, vector<1x128xf32>,
    return
  }
  func.func @transform_0(%arg0: i32) -> (i32, i32) {
    %c0_i32 = arith.constant 0 : i32
    %c0_i32_0 = arith.constant 0 : i32
    return %arg0, %c0_i32 : i32, i32
  }
  func.func @transform_1(%arg0: i32) -> (i32, i32) {
    %c0_i32 = arith.constant 0 : i32
    %c0_i32_0 = arith.constant 0 : i32
    %c0_i32_1 = arith.constant 0 : i32
    return %c0_i32, %c0_i32_0 : i32, i32
  }
  func.func @transform_2(%arg0: i32) -> (i32, i32) {
    %c0_i32 = arith.constant 0 : i32
    %c0_i32_0 = arith.constant 0 : i32
    %c0_i32_1 = arith.constant 0 : i32
    return %c0_i32, %c0_i32_0 : i32, i32
  }
  func.func @transform_3(%arg0: i32) -> (i32, i32) {
    %c0_i32 = arith.constant 0 : i32
    %c0_i32_0 = arith.constant 0 : i32
    %c0_i32_1 = arith.constant 0 : i32
    return %c0_i32, %c0_i32_0 : i32, i32
  }
  func.func @transform_4(%arg0: i32) -> (i32, i32) {
    %c0_i32 = arith.constant 0 : i32
    %c0_i32_0 = arith.constant 0 : i32
    %c0_i32_1 = arith.constant 0 : i32
    return %c0_i32, %c0_i32_0 : i32, i32
  }
  func.func @transform_5(%arg0: i32) -> (i32, i32) {
    %c0_i32 = arith.constant 0 : i32
    %c0_i32_0 = arith.constant 0 : i32
    %c0_i32_1 = arith.constant 0 : i32
    return %c0_i32, %c0_i32_0 : i32, i32
  }
  func.func @transform_6(%arg0: i32) -> (i32, i32) {
    %c0_i32 = arith.constant 0 : i32
    %c0_i32_0 = arith.constant 0 : i32
    return %c0_i32, %arg0 : i32, i32
  }
}

</mosaic_0001>

<llo_original>
// kernel: tpu_custom_call.1
$region0: #{tpu_custom_call.1}
  #allocation0 [shape = 'u32[]', space=smem, size = 0x4, offset = 0x4, fixed_abs, tag = 'smem constant byte address 0x4 - core index']
  #allocation1 [shape = 'u32[144,128]{1,0:T(1,128)}', space=vmem, size = 0x12000, scoped, tag = 'internal scratch']
  %s0 = inlined_call_operand.vmem [shape: f32[256,32], index: 0, kind: input, shape index: {}]
  %s1 = inlined_call_operand.vmem [shape: bf16[32,64], index: 1, kind: input, shape index: {}]
  %s2 = inlined_call_operand.vmem [shape: bf16[64,32], index: 2, kind: input, shape index: {}]
  %s3 = inlined_call_operand.vmem [shape: bf16[32,32], index: 3, kind: input, shape index: {}]
  %s4 = inlined_call_operand.vmem [shape: bf16[32,16], index: 4, kind: input, shape index: {}]
  %s5 = inlined_call_operand.vmem [shape: f32[16,128], index: 5, kind: input, shape index: {}]
  %s6 = inlined_call_operand.hbm [shape: f32[1,256], index: 6, kind: output, shape index: {}]
  %s7 = sld [smem:[#allocation0]]
  $region57: #{tpu_custom_call.1} parent=0
    _
  %s9 = ssub.s32 1, %s7
  %s10 = scalar_select 0, %s9, %s7
  $region1: #{tpu_custom_call.1} parent=0
    #allocation2 [shape = 'u8[1024]{0}', space=vmem, size = 0x400, scoped, tag = 'output window, operand 0']
    #allocation3 [shape = 's32[2]{0}', space=sflag, size = 0x8, scoped, tag = 'scoped memory for tpu_custom_call.1']
    %11 = vsyncpa [#allocation3], 0
    %s12 = scalar_lea.sflag [#allocation3], 1
    %13 = vsyncpa %s12, 0
    loop: start=0, step=1, limit=4
    $region2: #{tpu_custom_call.1} parent=1 // loop_pre_header
      _
    $region3: #{tpu_custom_call.1} parent=1 // loop_header
      %s15 = sphi 0, %s19
      %p16 = scmp.ge.s32.totalorder %s15, 4
      %s25 = sphi 0, %s27
      %s28 = sphi 0, %s25
      %s29 = sphi 0, %s28
      %s45 = sphi 0, %s29
      %s49 = sphi 0, %s49
      %s51 = sphi 0, %s49
      %s52 = sphi 0, %s51
      %s66 = sphi 0, %s52
      %s70 = sphi 0, %s70
      %s72 = sphi 0, %s70
      %s73 = sphi 0, %s72
      %s87 = sphi 0, %s73
      %s91 = sphi 0, %s91
      %s93 = sphi 0, %s91
      %s94 = sphi 0, %s93
      %s108 = sphi 0, %s94
      %s112 = sphi 0, %s112
      %s114 = sphi 0, %s112
      %s115 = sphi 0, %s114
      %s129 = sphi 0, %s115
      %s133 = sphi 0, %s133
      %s135 = sphi 0, %s133
      %s136 = sphi 0, %s135
      %s150 = sphi 0, %s136
      %s156 = sphi 0, %s158
      %s159 = sphi 0, %s156
      %s160 = sphi 0, %s159
      %s176 = sphi 0, %s160
    $region4: #{tpu_custom_call.1} parent=1 // loop_header_branch
      %18 = sbr.rel (%p16) target = $region8
    $region5: #{tpu_custom_call.1} parent=1 // loop_body
      %s20 = ssub.s32 %s15, 1
      %s21 = ssub.s32 %s15, 2
      %s22 = sadd.s32 %s15, 1
      %s23 = ssub.s32 %s15, %s22
      %p24 = scmp.eq.s32.totalorder %s23, 0
      %s26 = sadd.s32 %s25, 1
      %s27 = scalar_select %p24, %s25, %s26
      %p30 = pneg %p24
      %p31 = scmp.eq.s32.totalorder %s15, 1
      %p32 = por %p30, %p31
      %p33 = scmp.ne.s32.totalorder %s25, %s28
      %p34 = scmp.eq.s32.totalorder %s15, 0
      %p35 = por %p33, %p34
      %p36 = scmp.ne.s32.totalorder %s25, %s28
      %p37 = scmp.eq.s32.totalorder %s20, 1
      %p38 = por %p36, %p37
      %p39 = scmp.ne.s32.totalorder %s28, %s29
      %p40 = scmp.eq.s32.totalorder %s20, 0
      %p41 = por %p39, %p40
      %p42 = scmp.ne.s32.totalorder %s28, %s29
      %p43 = scmp.eq.s32.totalorder %s21, 1
      %p44 = por %p42, %p43
      %p46 = scmp.ne.s32.totalorder %s29, %s45
      %p47 = scmp.eq.s32.totalorder %s21, 0
      %p48 = por %p46, %p47
      %s50 = sadd.s32 %s49, 1
      %p53 = scmp.eq.s32.totalorder %s15, 1
      %p54 = scmp.ne.s32.totalorder %s49, %s51
      %p55 = scmp.eq.s32.totalorder %s15, 0
      %p56 = por %p54, %p55
      %p57 = scmp.ne.s32.totalorder %s49, %s51
      %p58 = scmp.eq.s32.totalorder %s20, 1
      %p59 = por %p57, %p58
      %p60 = scmp.ne.s32.totalorder %s51, %s52
      %p61 = scmp.eq.s32.totalorder %s20, 0
      %p62 = por %p60, %p61
      %p63 = scmp.ne.s32.totalorder %s51, %s52
      %p64 = scmp.eq.s32.totalorder %s21, 1
      %p65 = por %p63, %p64
      %p67 = scmp.ne.s32.totalorder %s52, %s66
      %p68 = scmp.eq.s32.totalorder %s21, 0
      %p69 = por %p67, %p68
      %s71 = sadd.s32 %s70, 1
      %p74 = scmp.eq.s32.totalorder %s15, 1
      %p75 = scmp.ne.s32.totalorder %s70, %s72
      %p76 = scmp.eq.s32.totalorder %s15, 0
      %p77 = por %p75, %p76
      %p78 = scmp.ne.s32.totalorder %s70, %s72
      %p79 = scmp.eq.s32.totalorder %s20, 1
      %p80 = por %p78, %p79
      %p81 = scmp.ne.s32.totalorder %s72, %s73
      %p82 = scmp.eq.s32.totalorder %s20, 0
      %p83 = por %p81, %p82
      %p84 = scmp.ne.s32.totalorder %s72, %s73
      %p85 = scmp.eq.s32.totalorder %s21, 1
      %p86 = por %p84, %p85
      %p88 = scmp.ne.s32.totalorder %s73, %s87
      %p89 = scmp.eq.s32.totalorder %s21, 0
      %p90 = por %p88, %p89
      %s92 = sadd.s32 %s91, 1
      %p95 = scmp.eq.s32.totalorder %s15, 1
      %p96 = scmp.ne.s32.totalorder %s91, %s93
      %p97 = scmp.eq.s32.totalorder %s15, 0
      %p98 = por %p96, %p97
      %p99 = scmp.ne.s32.totalorder %s91, %s93
      %p100 = scmp.eq.s32.totalorder %s20, 1
      %p101 = por %p99, %p100
      %p102 = scmp.ne.s32.totalorder %s93, %s94
      %p103 = scmp.eq.s32.totalorder %s20, 0
      %p104 = por %p102, %p103
      %p105 = scmp.ne.s32.totalorder %s93, %s94
      %p106 = scmp.eq.s32.totalorder %s21, 1
      %p107 = por %p105, %p106
      %p109 = scmp.ne.s32.totalorder %s94, %s108
      %p110 = scmp.eq.s32.totalorder %s21, 0
      %p111 = por %p109, %p110
      %s113 = sadd.s32 %s112, 1
      %p116 = scmp.eq.s32.totalorder %s15, 1
      %p117 = scmp.ne.s32.totalorder %s112, %s114
      %p118 = scmp.eq.s32.totalorder %s15, 0
      %p119 = por %p117, %p118
      %p120 = scmp.ne.s32.totalorder %s112, %s114
      %p121 = scmp.eq.s32.totalorder %s20, 1
      %p122 = por %p120, %p121
      %p123 = scmp.ne.s32.totalorder %s114, %s115
      %p124 = scmp.eq.s32.totalorder %s20, 0
      %p125 = por %p123, %p124
      %p126 = scmp.ne.s32.totalorder %s114, %s115
      %p127 = scmp.eq.s32.totalorder %s21, 1
      %p128 = por %p126, %p127
      %p130 = scmp.ne.s32.totalorder %s115, %s129
      %p131 = scmp.eq.s32.totalorder %s21, 0
      %p132 = por %p130, %p131
      %s134 = sadd.s32 %s133, 1
      %p137 = scmp.eq.s32.totalorder %s15, 1
      %p138 = scmp.ne.s32.totalorder %s133, %s135
      %p139 = scmp.eq.s32.totalorder %s15, 0
      %p140 = por %p138, %p139
      %p141 = scmp.ne.s32.totalorder %s133, %s135
      %p142 = scmp.eq.s32.totalorder %s20, 1
      %p143 = por %p141, %p142
      %p144 = scmp.ne.s32.totalorder %s135, %s136
      %p145 = scmp.eq.s32.totalorder %s20, 0
      %p146 = por %p144, %p145
      %p147 = scmp.ne.s32.totalorder %s135, %s136
      %p148 = scmp.eq.s32.totalorder %s21, 1
      %p149 = por %p147, %p148
      %p151 = scmp.ne.s32.totalorder %s136, %s150
      %p152 = scmp.eq.s32.totalorder %s21, 0
      %p153 = por %p151, %p152
      %s154 = ssub.s32 %s15, %s22
      %p155 = scmp.eq.s32.totalorder %s154, 0
      %s157 = sadd.s32 %s156, 1
      %s158 = scalar_select %p155, %s156, %s157
      %p161 = pneg %p155
      %p162 = scmp.eq.s32.totalorder %s15, 1
      %p163 = por %p161, %p162
      %p164 = scmp.ne.s32.totalorder %s156, %s159
      %p165 = scmp.eq.s32.totalorder %s15, 0
      %p166 = por %p164, %p165
      %p167 = scmp.ne.s32.totalorder %s156, %s159
      %p168 = scmp.eq.s32.totalorder %s20, 1
      %p169 = por %p167, %p168
      %p170 = scmp.ne.s32.totalorder %s159, %s160
      %p171 = scmp.eq.s32.totalorder %s20, 0
      %p172 = por %p170, %p171
      %p173 = scmp.ne.s32.totalorder %s159, %s160
      %p174 = scmp.eq.s32.totalorder %s21, 1
      %p175 = por %p173, %p174
      %p177 = scmp.ne.s32.totalorder %s160, %s176
      %p178 = scmp.eq.s32.totalorder %s21, 0
      %p179 = por %p177, %p178
      %p180 = scmp.le.s32.totalorder 1, %s15
      %p181 = scmp.lt.s32.totalorder %s15, 3
      %p182 = pnand %p180, %p181
      %p183 = pneg %p182
      // Predicated region
      $region9: #{tpu_custom_call.1} parent=5 // pred_check
        _
      $region10: #{tpu_custom_call.1} parent=5 // pred_check_branch
        %185 = sbr.rel (%p182) target = $region12
      $region11: #{tpu_custom_call.1} parent=5 // pred_region
        %s186 = ssub.s32 %s15, 1
        // Predicated region
        $region13: #{tpu_custom_call.1} parent=11 // pred_check
          %p187 = pneg %p62
        $region14: #{tpu_custom_call.1} parent=11 // pred_check_branch
          %189 = sbr.rel (%p187) target = $region16
        $region15: #{tpu_custom_call.1} parent=11 // pred_region
          _
        $region16: #{tpu_custom_call.1} parent=11 // pred_fallthru
          _
        // Predicated region
        $region17: #{tpu_custom_call.1} parent=11 // pred_check
          %p190 = pneg %p83
        $region18: #{tpu_custom_call.1} parent=11 // pred_check_branch
          %192 = sbr.rel (%p190) target = $region20
        $region19: #{tpu_custom_call.1} parent=11 // pred_region
          _
        $region20: #{tpu_custom_call.1} parent=11 // pred_fallthru
          _
        // Predicated region
        $region21: #{tpu_custom_call.1} parent=11 // pred_check
          %p193 = pneg %p104
        $region22: #{tpu_custom_call.1} parent=11 // pred_check_branch
          %195 = sbr.rel (%p193) target = $region24
        $region23: #{tpu_custom_call.1} parent=11 // pred_region
          _
        $region24: #{tpu_custom_call.1} parent=11 // pred_fallthru
          _
        // Predicated region
        $region25: #{tpu_custom_call.1} parent=11 // pred_check
          %p196 = pneg %p125
        $region26: #{tpu_custom_call.1} parent=11 // pred_check_branch
          %198 = sbr.rel (%p196) target = $region28
        $region27: #{tpu_custom_call.1} parent=11 // pred_region
          _
        $region28: #{tpu_custom_call.1} parent=11 // pred_fallthru
          _
        // Predicated region
        $region29: #{tpu_custom_call.1} parent=11 // pred_check
          %p199 = pneg %p146
        $region30: #{tpu_custom_call.1} parent=11 // pred_check_branch
          %201 = sbr.rel (%p199) target = $region32
        $region31: #{tpu_custom_call.1} parent=11 // pred_region
          _
        $region32: #{tpu_custom_call.1} parent=11 // pred_fallthru
          _
      $region12: #{tpu_custom_call.1} parent=5 // pred_fallthru
        _
      %p202 = scmp.lt.s32.totalorder %s15, 2
      // Predicated region
      $region33: #{tpu_custom_call.1} parent=5 // pred_check
        %p203 = pneg %p202
      $region34: #{tpu_custom_call.1} parent=5 // pred_check_branch
        %205 = sbr.rel (%p203) target = $region36
      $region35: #{tpu_custom_call.1} parent=5 // pred_region
        // Predicated region
        $region37: #{tpu_custom_call.1} parent=35 // pred_check
          %p206 = pneg %p35
        $region38: #{tpu_custom_call.1} parent=35 // pred_check_branch
          %208 = sbr.rel (%p206) target = $region40
        $region39: #{tpu_custom_call.1} parent=35 // pred_region
          %s209 = smul.u32 16, %s15
          %p210 = scmp.lt.s32.totalorder %s209, 31
          %s211 = scalar_select %p210, %s209, 31
          %s212 = smul.addr %s211, 8
          %s213 = scalar_lea.vmem %s0, %s212
          %s214 = smul.u32 16, %s15
        $region40: #{tpu_custom_call.1} parent=35 // pred_fallthru
          _
      $region36: #{tpu_custom_call.1} parent=5 // pred_fallthru
        _
      %p215 = scmp.le.s32.totalorder 1, %s15
      %p216 = scmp.lt.s32.totalorder %s15, 3
      %p217 = pnand %p215, %p216
      %p218 = pneg %p217
      // Predicated region
      $region41: #{tpu_custom_call.1} parent=5 // pred_check
        _
      $region42: #{tpu_custom_call.1} parent=5 // pred_check_branch
        %220 = sbr.rel (%p217) target = $region44
      $region43: #{tpu_custom_call.1} parent=5 // pred_region
        %s221 = ssub.s32 %s15, 1
        %s222 = smul.u32 16, %s20
        %p223 = scmp.lt.s32.totalorder %s222, 31
        %s224 = scalar_select %p223, %s222, 31
        %s225 = smul.addr %s224, 8
        %s226 = scalar_lea.vmem %s0, %s225
        %p227 = pneg %p41
        %p228 = pneg %p38
        %p229 = pneg %p62
        %p230 = pneg %p59
        %p231 = pneg %p83
        %p232 = pneg %p80
        %p233 = pneg %p104
        %p234 = pneg %p101
        %p235 = pneg %p125
        %p236 = pneg %p122
        %p237 = pneg %p146
        %p238 = pneg %p143
        %p239 = pneg %p172
        %p240 = pneg %p169
        %s241 = sand.u32 %s159, 1
        %s242 = scalar_lea.sflag [#allocation3], %s241
        %s243 = sand.u32 %s159, 1
        %s244 = scalar_lea.vmem [#allocation2], %s243
        %s245 = smul.u32 16, %s20
        %p246 = scmp.lt.s32.totalorder %s245, 31
        %s247 = scalar_select %p246, %s245, 31
        %s248 = smul.addr %s247, 8
        %s249 = scalar_lea.vmem %s0, %s248
        %s250 = smul.u32 16, %s20
        %v252 = vld [vmem:[%s5] sm:$0xff]
        %v253 = vld [vmem:[%s5 + $0x8] sm:$0xff]
        %v254 = vpack.c.bf16 %v253, %v253
        %v255 = vld [vmem:[%s249] sm:$0xff]
        %v256 = vld [vmem:[%s249 + $0x8] sm:$0xff]
        %v257 = vld [vmem:[%s249 + $0x10] sm:$0xff]
        %v258 = vld [vmem:[%s249 + $0x18] sm:$0xff]
        %v259 = vld [vmem:[%s249 + $0x20] sm:$0xff]
        %v260 = vld [vmem:[%s249 + $0x28] sm:$0xff]
        %v261 = vld [vmem:[%s249 + $0x30] sm:$0xff]
        %v262 = vld [vmem:[%s249 + $0x38] sm:$0xff]
        %v263 = vld [vmem:[%s249 + $0x40] sm:$0xff]
        %v264 = vld [vmem:[%s249 + $0x48] sm:$0xff]
        %v265 = vld [vmem:[%s249 + $0x50] sm:$0xff]
        %v266 = vld [vmem:[%s249 + $0x58] sm:$0xff]
        %v267 = vld [vmem:[%s249 + $0x60] sm:$0xff]
        %v268 = vld [vmem:[%s249 + $0x68] sm:$0xff]
        %v269 = vld [vmem:[%s249 + $0x70] sm:$0xff]
        %v270 = vld [vmem:[%s249 + $0x78] sm:$0xff]
        %v271 = vpack.c.bf16 %v256, %v255
        %v272 = vpack.c.bf16 %v258, %v257
        %v273 = vpack.c.bf16 %v260, %v259
        %v274 = vpack.c.bf16 %v262, %v261
        %v275 = vpack.c.bf16 %v264, %v263
        %v276 = vpack.c.bf16 %v266, %v265
        %v277 = vpack.c.bf16 %v268, %v267
        %v278 = vpack.c.bf16 %v270, %v269
        %v279 = vld [vmem:[%s1] sm:$0xf]
        %v280 = vld [vmem:[%s1 + $0x4] sm:$0xf]
        %v281 = vld [vmem:[%s1 + $0x8] sm:$0xf]
        %v282 = vld [vmem:[%s1 + $0xc] sm:$0xf]
        %v283 = vlaneseq
        %v284 = vshrl.u32 %v283, 7
        %v285 = vsub.s32 0, %v284
        %v286 = vrot.slane %v252, %v285
        %v291 = vunpack.c.l.b16 %v279
        %v292 = vunpack.c.l.b16 %v280
        %v293 = vunpack.c.l.b16 %v281
        %v294 = vunpack.c.l.b16 %v282
        %v295 = vpack.c.b16 %v292, %v291
        %v296 = vpack.c.b16 %v294, %v293
        %vm299 = vcmask 261120
        %v301 = vsel %vm299, %v271, 0
        %v304 = vsel %vm299, %v272, 0
        %v307 = vsel %vm299, %v273, 0
        %v310 = vsel %vm299, %v274, 0
        %v313 = vsel %vm299, %v275, 0
        %v316 = vsel %vm299, %v276, 0
        %v319 = vsel %vm299, %v277, 0
        %v322 = vsel %vm299, %v278, 0
        %324 = vmatprep.subr.bf16.mxu0 0
        %325 = vmatpush1.bf16.msra.mxu0 %v295
        %326 = vmatprep.subr.bf16.mxu0 0
        %327 = vmatpush1.bf16.msra.mxu0 %v296
        %328 = vmatprep.subr.bf16.mxu0 0
        %329 = vmatpush1.bf16.msra.mxu0 0
        %330 = vmatprep.subr.bf16.mxu0 0
        %331 = vmatpush1.bf16.msra.mxu0 0
        %332 = vmatprep.subr.bf16.mxu0 0
        %333 = vmatpush1.bf16.msra.mxu0 0
        %334 = vmatprep.subr.bf16.mxu0 0
        %335 = vmatpush1.bf16.msra.mxu0 0
        %336 = vmatprep.subr.bf16.mxu0 0
        %337 = vmatpush1.bf16.msra.mxu0 0
        %338 = vmatprep.subr.bf16.mxu0 0
        %339 = vmatpush1.bf16.msra.mxu0 0
        %340 = vmatprep.subr.bf16.mxu0 0
        %341 = vmatpush1.bf16.msra.mxu0 0
        %342 = vmatprep.subr.bf16.mxu0 0
        %343 = vmatpush1.bf16.msra.mxu0 0
        %344 = vmatprep.subr.bf16.mxu0 0
        %345 = vmatpush1.bf16.msra.mxu0 0
        %346 = vmatprep.subr.bf16.mxu0 0
        %347 = vmatpush1.bf16.msra.mxu0 0
        %348 = vmatprep.subr.bf16.mxu0 0
        %349 = vmatpush1.bf16.msra.mxu0 0
        %350 = vmatprep.subr.bf16.mxu0 0
        %351 = vmatpush1.bf16.msra.mxu0 0
        %352 = vmatprep.subr.bf16.mxu0 0
        %353 = vmatpush1.bf16.msra.mxu0 0
        %354 = vmatprep.subr.bf16.mxu0 0
        %355 = vmatpush1.bf16.msra.mxu0 0
        %356 = vmatprep.mubr.bf16.mxu0 0
        %357 = vmatmul.mubr.bf16.gmra.mrb[0].mxu0 %v301
        %v358 = vpop.f32.mrb[0].mxu0
        %v359 = vadd.f32 %v286, %v358
        %v360 = vpop.f32.mrb[0].mxu0
        %v361 = vpop.f32.mrb[0].mxu0
        %v362 = vadd.f32 %v286, %v361
        %v363 = vpop.f32.mrb[0].mxu0
        %364 = vmatprep.mubr.bf16.mxu0 0
        %365 = vmatmul.mubr.bf16.gmra.mrb[0].mxu0 %v304
        %v366 = vpop.f32.mrb[0].mxu0
        %v367 = vadd.f32 %v286, %v366
        %v368 = vpop.f32.mrb[0].mxu0
        %v369 = vpop.f32.mrb[0].mxu0
        %v370 = vadd.f32 %v286, %v369
        %v371 = vpop.f32.mrb[0].mxu0
        %372 = vmatprep.mubr.bf16.mxu0 0
        %373 = vmatmul.mubr.bf16.gmra.mrb[0].mxu0 %v307
        %v374 = vpop.f32.mrb[0].mxu0
        %v375 = vadd.f32 %v286, %v374
        %v376 = vpop.f32.mrb[0].mxu0
        %v377 = vpop.f32.mrb[0].mxu0
        %v378 = vadd.f32 %v286, %v377
        %v379 = vpop.f32.mrb[0].mxu0
        %380 = vmatprep.mubr.bf16.mxu0 0
        %381 = vmatmul.mubr.bf16.gmra.mrb[0].mxu0 %v310
        %v382 = vpop.f32.mrb[0].mxu0
        %v383 = vadd.f32 %v286, %v382
        %v384 = vpop.f32.mrb[0].mxu0
        %v385 = vpop.f32.mrb[0].mxu0
        %v386 = vadd.f32 %v286, %v385
        %v387 = vpop.f32.mrb[0].mxu0
        %388 = vmatprep.mubr.bf16.mxu0 0
        %389 = vmatmul.mubr.bf16.gmra.mrb[0].mxu0 %v313
        %v390 = vpop.f32.mrb[0].mxu0
        %v391 = vadd.f32 %v286, %v390
        %v392 = vpop.f32.mrb[0].mxu0
        %v393 = vpop.f32.mrb[0].mxu0
        %v394 = vadd.f32 %v286, %v393
        %v395 = vpop.f32.mrb[0].mxu0
        %396 = vmatprep.mubr.bf16.mxu0 0
        %397 = vmatmul.mubr.bf16.gmra.mrb[0].mxu0 %v316
        %v398 = vpop.f32.mrb[0].mxu0
        %v399 = vadd.f32 %v286, %v398
        %v400 = vpop.f32.mrb[0].mxu0
        %v401 = vpop.f32.mrb[0].mxu0
        %v402 = vadd.f32 %v286, %v401
        %v403 = vpop.f32.mrb[0].mxu0
        %404 = vmatprep.mubr.bf16.mxu0 0
        %405 = vmatmul.mubr.bf16.gmra.mrb[0].mxu0 %v319
        %v406 = vpop.f32.mrb[0].mxu0
        %v407 = vadd.f32 %v286, %v406
        %v408 = vpop.f32.mrb[0].mxu0
        %v409 = vpop.f32.mrb[0].mxu0
        %v410 = vadd.f32 %v286, %v409
        %v411 = vpop.f32.mrb[0].mxu0
        %412 = vmatprep.mubr.bf16.mxu0 0
        %413 = vmatmul.mubr.bf16.gmra.mrb[0].mxu0 %v322
        %v414 = vpop.f32.mrb[0].mxu0
        %v415 = vadd.f32 %v286, %v414
        %v416 = vpop.f32.mrb[0].mxu0
        %v417 = vpop.f32.mrb[0].mxu0
        %v418 = vadd.f32 %v286, %v417
        %v419 = vpop.f32.mrb[0].mxu0
        %420 = vdwg.mxu0
        %v421 = vmul.f32 %v359, 0.5
        %v422 = vmul.f32 %v362, 0.5
        %v423 = vmul.f32 %v367, 0.5
        %v424 = vmul.f32 %v370, 0.5
        %v425 = vmul.f32 %v375, 0.5
        %v426 = vmul.f32 %v378, 0.5
        %v427 = vmul.f32 %v383, 0.5
        %v428 = vmul.f32 %v386, 0.5
        %v429 = vmul.f32 %v391, 0.5
        %v430 = vmul.f32 %v394, 0.5
        %v431 = vmul.f32 %v399, 0.5
        %v432 = vmul.f32 %v402, 0.5
        %v433 = vmul.f32 %v407, 0.5
        %v434 = vmul.f32 %v410, 0.5
        %v435 = vmul.f32 %v415, 0.5
        %v436 = vmul.f32 %v418, 0.5
        %v437 = vmul.f32 %v359, 0.70710677
        %v438 = vmul.f32 %v362, 0.70710677
        %v439 = vmul.f32 %v367, 0.70710677
        %v440 = vmul.f32 %v370, 0.70710677
        %v441 = vmul.f32 %v375, 0.70710677
        %v442 = vmul.f32 %v378, 0.70710677
        %v443 = vmul.f32 %v383, 0.70710677
        %v444 = vmul.f32 %v386, 0.70710677
        %v445 = vmul.f32 %v391, 0.70710677
        %v446 = vmul.f32 %v394, 0.70710677
        %v447 = vmul.f32 %v399, 0.70710677
        %v448 = vmul.f32 %v402, 0.70710677
        %v449 = vmul.f32 %v407, 0.70710677
        %v450 = vmul.f32 %v410, 0.70710677
        %v451 = vmul.f32 %v415, 0.70710677
        %v452 = vmul.f32 %v418, 0.70710677
        %v453 = verf.f32.pop %v437
        %v454 = verf.f32.pop %v438
        %v455 = verf.f32.pop %v439
        %v456 = verf.f32.pop %v440
        %v457 = verf.f32.pop %v441
        %v458 = verf.f32.pop %v442
        %v459 = verf.f32.pop %v443
        %v460 = verf.f32.pop %v444
        %v461 = verf.f32.pop %v445
        %v462 = verf.f32.pop %v446
        %v463 = verf.f32.pop %v447
        %v464 = verf.f32.pop %v448
        %v465 = verf.f32.pop %v449
        %v466 = verf.f32.pop %v450
        %v467 = verf.f32.pop %v451
        %v468 = verf.f32.pop %v452
        %v469 = vadd.f32 %v453, 1.0
        %v470 = vadd.f32 %v454, 1.0
        %v471 = vadd.f32 %v455, 1.0
        %v472 = vadd.f32 %v456, 1.0
        %v473 = vadd.f32 %v457, 1.0
        %v474 = vadd.f32 %v458, 1.0
        %v475 = vadd.f32 %v459, 1.0
        %v476 = vadd.f32 %v460, 1.0
        %v477 = vadd.f32 %v461, 1.0
        %v478 = vadd.f32 %v462, 1.0
        %v479 = vadd.f32 %v463, 1.0
        %v480 = vadd.f32 %v464, 1.0
        %v481 = vadd.f32 %v465, 1.0
        %v482 = vadd.f32 %v466, 1.0
        %v483 = vadd.f32 %v467, 1.0
        %v484 = vadd.f32 %v468, 1.0
        %v485 = vmul.f32 %v421, %v469
        %v486 = vmul.f32 %v422, %v470
        %v487 = vmul.f32 %v423, %v471
        %v488 = vmul.f32 %v424, %v472
        %v489 = vmul.f32 %v425, %v473
        %v490 = vmul.f32 %v426, %v474
        %v491 = vmul.f32 %v427, %v475
        %v492 = vmul.f32 %v428, %v476
        %v493 = vmul.f32 %v429, %v477
        %v494 = vmul.f32 %v430, %v478
        %v495 = vmul.f32 %v431, %v479
        %v496 = vmul.f32 %v432, %v480
        %v497 = vmul.f32 %v433, %v481
        %v498 = vmul.f32 %v434, %v482
        %v499 = vmul.f32 %v435, %v483
        %v500 = vmul.f32 %v436, %v484
        %vm501 = vcmask 523264
        %v502 = vsel %vm501, %v485, 0.0
        %503 = vadd.xlane.f32.xlu0 %v502
        %v504 = vpop.xlane.xlu0 %503
        %v505 = vsel %vm501, %v486, 0.0
        %506 = vadd.xlane.f32.xlu0 %v505
        %v507 = vpop.xlane.xlu0 %506
        %v508 = vsel %vm501, %v487, 0.0
        %509 = vadd.xlane.f32.xlu0 %v508
        %v510 = vpop.xlane.xlu0 %509
        %v511 = vsel %vm501, %v488, 0.0
        %512 = vadd.xlane.f32.xlu0 %v511
        %v513 = vpop.xlane.xlu0 %512
        %v514 = vsel %vm501, %v489, 0.0
        %515 = vadd.xlane.f32.xlu0 %v514
        %v516 = vpop.xlane.xlu0 %515
        %v517 = vsel %vm501, %v490, 0.0
        %518 = vadd.xlane.f32.xlu0 %v517
        %v519 = vpop.xlane.xlu0 %518
        %v520 = vsel %vm501, %v491, 0.0
        %521 = vadd.xlane.f32.xlu0 %v520
        %v522 = vpop.xlane.xlu0 %521
        %v523 = vsel %vm501, %v492, 0.0
        %524 = vadd.xlane.f32.xlu0 %v523
        %v525 = vpop.xlane.xlu0 %524
        %v526 = vsel %vm501, %v493, 0.0
        %527 = vadd.xlane.f32.xlu0 %v526
        %v528 = vpop.xlane.xlu0 %527
        %v529 = vsel %vm501, %v494, 0.0
        %530 = vadd.xlane.f32.xlu0 %v529
        %v531 = vpop.xlane.xlu0 %530
        %v532 = vsel %vm501, %v495, 0.0
        %533 = vadd.xlane.f32.xlu0 %v532
        %v534 = vpop.xlane.xlu0 %533
        %v535 = vsel %vm501, %v496, 0.0
        %536 = vadd.xlane.f32.xlu0 %v535
        %v537 = vpop.xlane.xlu0 %536
        %v538 = vsel %vm501, %v497, 0.0
        %539 = vadd.xlane.f32.xlu0 %v538
        %v540 = vpop.xlane.xlu0 %539
        %v541 = vsel %vm501, %v498, 0.0
        %542 = vadd.xlane.f32.xlu0 %v541
        %v543 = vpop.xlane.xlu0 %542
        %v544 = vsel %vm501, %v499, 0.0
        %545 = vadd.xlane.f32.xlu0 %v544
        %v546 = vpop.xlane.xlu0 %545
        %v547 = vsel %vm501, %v500, 0.0
        %548 = vadd.xlane.f32.xlu0 %v547
        %v549 = vpop.xlane.xlu0 %548
        %v550 = vrcp.pop 64.0
        %v551 = vmul.f32 %v504, %v550
        %v552 = vmul.f32 %v507, %v550
        %v553 = vmul.f32 %v510, %v550
        %v554 = vmul.f32 %v513, %v550
        %v555 = vmul.f32 %v516, %v550
        %v556 = vmul.f32 %v519, %v550
        %v557 = vmul.f32 %v522, %v550
        %v558 = vmul.f32 %v525, %v550
        %v559 = vmul.f32 %v528, %v550
        %v560 = vmul.f32 %v531, %v550
        %v561 = vmul.f32 %v534, %v550
        %v562 = vmul.f32 %v537, %v550
        %v563 = vmul.f32 %v540, %v550
        %v564 = vmul.f32 %v543, %v550
        %v565 = vmul.f32 %v546, %v550
        %v566 = vmul.f32 %v549, %v550
        %v567 = vsub.f32 %v485, %v551
        %v568 = vsub.f32 %v486, %v552
        %v569 = vsub.f32 %v487, %v553
        %v570 = vsub.f32 %v488, %v554
        %v571 = vsub.f32 %v489, %v555
        %v572 = vsub.f32 %v490, %v556
        %v573 = vsub.f32 %v491, %v557
        %v574 = vsub.f32 %v492, %v558
        %v575 = vsub.f32 %v493, %v559
        %v576 = vsub.f32 %v494, %v560
        %v577 = vsub.f32 %v495, %v561
        %v578 = vsub.f32 %v496, %v562
        %v579 = vsub.f32 %v497, %v563
        %v580 = vsub.f32 %v498, %v564
        %v581 = vsub.f32 %v499, %v565
        %v582 = vsub.f32 %v500, %v566
        %v583 = vmul.f32 %v567, %v567
        %v584 = vmul.f32 %v568, %v568
        %v585 = vmul.f32 %v569, %v569
        %v586 = vmul.f32 %v570, %v570
        %v587 = vmul.f32 %v571, %v571
        %v588 = vmul.f32 %v572, %v572
        %v589 = vmul.f32 %v573, %v573
        %v590 = vmul.f32 %v574, %v574
        %v591 = vmul.f32 %v575, %v575
        %v592 = vmul.f32 %v576, %v576
        %v593 = vmul.f32 %v577, %v577
        %v594 = vmul.f32 %v578, %v578
        %v595 = vmul.f32 %v579, %v579
        %v596 = vmul.f32 %v580, %v580
        %v597 = vmul.f32 %v581, %v581
        %v598 = vmul.f32 %v582, %v582
        %v599 = vsel %vm501, %v583, 0.0
        %600 = vadd.xlane.f32.xlu0 %v599
        %v601 = vpop.xlane.xlu0 %600
        %v602 = vsel %vm501, %v584, 0.0
        %603 = vadd.xlane.f32.xlu0 %v602
        %v604 = vpop.xlane.xlu0 %603
        %v605 = vsel %vm501, %v585, 0.0
        %606 = vadd.xlane.f32.xlu0 %v605
        %v607 = vpop.xlane.xlu0 %606
        %v608 = vsel %vm501, %v586, 0.0
        %609 = vadd.xlane.f32.xlu0 %v608
        %v610 = vpop.xlane.xlu0 %609
        %v611 = vsel %vm501, %v587, 0.0
        %612 = vadd.xlane.f32.xlu0 %v611
        %v613 = vpop.xlane.xlu0 %612
        %v614 = vsel %vm501, %v588, 0.0
        %615 = vadd.xlane.f32.xlu0 %v614
        %v616 = vpop.xlane.xlu0 %615
        %v617 = vsel %vm501, %v589, 0.0
        %618 = vadd.xlane.f32.xlu0 %v617
        %v619 = vpop.xlane.xlu0 %618
        %v620 = vsel %vm501, %v590, 0.0
        %621 = vadd.xlane.f32.xlu0 %v620
        %v622 = vpop.xlane.xlu0 %621
        %v623 = vsel %vm501, %v591, 0.0
        %624 = vadd.xlane.f32.xlu0 %v623
        %v625 = vpop.xlane.xlu0 %624
        %v626 = vsel %vm501, %v592, 0.0
        %627 = vadd.xlane.f32.xlu0 %v626
        %v628 = vpop.xlane.xlu0 %627
        %v629 = vsel %vm501, %v593, 0.0
        %630 = vadd.xlane.f32.xlu0 %v629
        %v631 = vpop.xlane.xlu0 %630
        %v632 = vsel %vm501, %v594, 0.0
        %633 = vadd.xlane.f32.xlu0 %v632
        %v634 = vpop.xlane.xlu0 %633
        %v635 = vsel %vm501, %v595, 0.0
        %636 = vadd.xlane.f32.xlu0 %v635
        %v637 = vpop.xlane.xlu0 %636
        %v638 = vsel %vm501, %v596, 0.0
        %639 = vadd.xlane.f32.xlu0 %v638
        %v640 = vpop.xlane.xlu0 %639
        %v641 = vsel %vm501, %v597, 0.0
        %642 = vadd.xlane.f32.xlu0 %v641
        %v643 = vpop.xlane.xlu0 %642
        %v644 = vsel %vm501, %v598, 0.0
        %645 = vadd.xlane.f32.xlu0 %v644
        %v646 = vpop.xlane.xlu0 %645
        %v647 = vmul.f32 %v601, %v550
        %v648 = vmul.f32 %v604, %v550
        %v649 = vmul.f32 %v607, %v550
        %v650 = vmul.f32 %v610, %v550
        %v651 = vmul.f32 %v613, %v550
        %v652 = vmul.f32 %v616, %v550
        %v653 = vmul.f32 %v619, %v550
        %v654 = vmul.f32 %v622, %v550
        %v655 = vmul.f32 %v625, %v550
        %v656 = vmul.f32 %v628, %v550
        %v657 = vmul.f32 %v631, %v550
        %v658 = vmul.f32 %v634, %v550
        %v659 = vmul.f32 %v637, %v550
        %v660 = vmul.f32 %v640, %v550
        %v661 = vmul.f32 %v643, %v550
        %v662 = vmul.f32 %v646, %v550
        %v663 = vadd.f32 %v647, 1e-05
        %v664 = vadd.f32 %v648, 1e-05
        %v665 = vadd.f32 %v649, 1e-05
        %v666 = vadd.f32 %v650, 1e-05
        %v667 = vadd.f32 %v651, 1e-05
        %v668 = vadd.f32 %v652, 1e-05
        %v669 = vadd.f32 %v653, 1e-05
        %v670 = vadd.f32 %v654, 1e-05
        %v671 = vadd.f32 %v655, 1e-05
        %v672 = vadd.f32 %v656, 1e-05
        %v673 = vadd.f32 %v657, 1e-05
        %v674 = vadd.f32 %v658, 1e-05
        %v675 = vadd.f32 %v659, 1e-05
        %v676 = vadd.f32 %v660, 1e-05
        %v677 = vadd.f32 %v661, 1e-05
        %v678 = vadd.f32 %v662, 1e-05
        %v679 = vrsqrt.pop %v663
        %v680 = vrsqrt.pop %v664
        %v681 = vrsqrt.pop %v665
        %v682 = vrsqrt.pop %v666
        %v683 = vrsqrt.pop %v667
        %v684 = vrsqrt.pop %v668
        %v685 = vrsqrt.pop %v669
        %v686 = vrsqrt.pop %v670
        %v687 = vrsqrt.pop %v671
        %v688 = vrsqrt.pop %v672
        %v689 = vrsqrt.pop %v673
        %v690 = vrsqrt.pop %v674
        %v691 = vrsqrt.pop %v675
        %v692 = vrsqrt.pop %v676
        %v693 = vrsqrt.pop %v677
        %v694 = vrsqrt.pop %v678
        %v695 = vmul.f32 %v567, %v679
        %v696 = vmul.f32 %v568, %v680
        %v697 = vmul.f32 %v569, %v681
        %v698 = vmul.f32 %v570, %v682
        %v699 = vmul.f32 %v571, %v683
        %v700 = vmul.f32 %v572, %v684
        %v701 = vmul.f32 %v573, %v685
        %v702 = vmul.f32 %v574, %v686
        %v703 = vmul.f32 %v575, %v687
        %v704 = vmul.f32 %v576, %v688
        %v705 = vmul.f32 %v577, %v689
        %v706 = vmul.f32 %v578, %v690
        %v707 = vmul.f32 %v579, %v691
        %v708 = vmul.f32 %v580, %v692
        %v709 = vmul.f32 %v581, %v693
        %v710 = vmul.f32 %v582, %v694
        %v711 = vlaneseq
        %v712 = vshrl.u32 %v711, 7
        %v713 = vsub.s32 1, %v712
        %v714 = vrot.slane %v252, %v713
        %v715 = vmul.f32 %v695, %v714
        %v716 = vmul.f32 %v696, %v714
        %v717 = vmul.f32 %v697, %v714
        %v718 = vmul.f32 %v698, %v714
        %v719 = vmul.f32 %v699, %v714
        %v720 = vmul.f32 %v700, %v714
        %v721 = vmul.f32 %v701, %v714
        %v722 = vmul.f32 %v702, %v714
        %v723 = vmul.f32 %v703, %v714
        %v724 = vmul.f32 %v704, %v714
        %v725 = vmul.f32 %v705, %v714
        %v726 = vmul.f32 %v706, %v714
        %v727 = vmul.f32 %v707, %v714
        %v728 = vmul.f32 %v708, %v714
        %v729 = vmul.f32 %v709, %v714
        %v730 = vmul.f32 %v710, %v714
        %v731 = vlaneseq
        %v732 = vshrl.u32 %v731, 7
        %v733 = vsub.s32 2, %v732
        %v734 = vrot.slane %v252, %v733
        %v735 = vadd.f32 %v715, %v734
        %v736 = vadd.f32 %v716, %v734
        %v737 = vadd.f32 %v717, %v734
        %v738 = vadd.f32 %v718, %v734
        %v739 = vadd.f32 %v719, %v734
        %v740 = vadd.f32 %v720, %v734
        %v741 = vadd.f32 %v721, %v734
        %v742 = vadd.f32 %v722, %v734
        %v743 = vadd.f32 %v723, %v734
        %v744 = vadd.f32 %v724, %v734
        %v745 = vadd.f32 %v725, %v734
        %v746 = vadd.f32 %v726, %v734
        %v747 = vadd.f32 %v727, %v734
        %v748 = vadd.f32 %v728, %v734
        %v749 = vadd.f32 %v729, %v734
        %v750 = vadd.f32 %v730, %v734
        %v751 = vpack.c.bf16 %v736, %v735
        %v752 = vpack.c.bf16 %v738, %v737
        %v753 = vpack.c.bf16 %v740, %v739
        %v754 = vpack.c.bf16 %v742, %v741
        %v755 = vpack.c.bf16 %v744, %v743
        %v756 = vpack.c.bf16 %v746, %v745
        %v757 = vpack.c.bf16 %v748, %v747
        %v758 = vpack.c.bf16 %v750, %v749
        %v759 = vld [vmem:[%s2] sm:$0xf]
        %v760 = vld [vmem:[%s2 + $0x4] sm:$0xf]
        %v761 = vld [vmem:[%s2 + $0x8] sm:$0xf]
        %v762 = vld [vmem:[%s2 + $0xc] sm:$0xf]
        %v763 = vld [vmem:[%s2 + $0x10] sm:$0xf]
        %v764 = vld [vmem:[%s2 + $0x14] sm:$0xf]
        %v765 = vld [vmem:[%s2 + $0x18] sm:$0xf]
        %v766 = vld [vmem:[%s2 + $0x1c] sm:$0xf]
        %v767 = vlaneseq
        %v768 = vshrl.u32 %v767, 7
        %v769 = vsub.s32 3, %v768
        %v770 = vrot.slane %v252, %v769
        %v779 = vunpack.c.l.b16 %v759
        %v780 = vunpack.c.l.b16 %v760
        %v781 = vunpack.c.l.b16 %v761
        %v782 = vunpack.c.l.b16 %v762
        %v783 = vunpack.c.l.b16 %v763
        %v784 = vunpack.c.l.b16 %v764
        %v785 = vunpack.c.l.b16 %v765
        %v786 = vunpack.c.l.b16 %v766
        %v787 = vpack.c.b16 %v780, %v779
        %v788 = vpack.c.b16 %v782, %v781
        %v789 = vpack.c.b16 %v784, %v783
        %v790 = vpack.c.b16 %v786, %v785
        %v796 = vsel %vm501, %v751, 0
        %v799 = vsel %vm501, %v752, 0
        %v802 = vsel %vm501, %v753, 0
        %v805 = vsel %vm501, %v754, 0
        %v808 = vsel %vm501, %v755, 0
        %v811 = vsel %vm501, %v756, 0
        %v814 = vsel %vm501, %v757, 0
        %v817 = vsel %vm501, %v758, 0
        %819 = vmatprep.subr.bf16.mxu0 0
        %820 = vmatpush1.bf16.msra.mxu0 %v787
        %821 = vmatprep.subr.bf16.mxu0 0
        %822 = vmatpush1.bf16.msra.mxu0 %v788
        %823 = vmatprep.subr.bf16.mxu0 0
        %824 = vmatpush1.bf16.msra.mxu0 %v789
        %825 = vmatprep.subr.bf16.mxu0 0
        %826 = vmatpush1.bf16.msra.mxu0 %v790
        %827 = vmatprep.subr.bf16.mxu0 0
        %828 = vmatpush1.bf16.msra.mxu0 0
        %829 = vmatprep.subr.bf16.mxu0 0
        %830 = vmatpush1.bf16.msra.mxu0 0
        %831 = vmatprep.subr.bf16.mxu0 0
        %832 = vmatpush1.bf16.msra.mxu0 0
        %833 = vmatprep.subr.bf16.mxu0 0
        %834 = vmatpush1.bf16.msra.mxu0 0
        %835 = vmatprep.subr.bf16.mxu0 0
        %836 = vmatpush1.bf16.msra.mxu0 0
        %837 = vmatprep.subr.bf16.mxu0 0
        %838 = vmatpush1.bf16.msra.mxu0 0
        %839 = vmatprep.subr.bf16.mxu0 0
        %840 = vmatpush1.bf16.msra.mxu0 0
        %841 = vmatprep.subr.bf16.mxu0 0
        %842 = vmatpush1.bf16.msra.mxu0 0
        %843 = vmatprep.subr.bf16.mxu0 0
        %844 = vmatpush1.bf16.msra.mxu0 0
        %845 = vmatprep.subr.bf16.mxu0 0
        %846 = vmatpush1.bf16.msra.mxu0 0
        %847 = vmatprep.subr.bf16.mxu0 0
        %848 = vmatpush1.bf16.msra.mxu0 0
        %849 = vmatprep.subr.bf16.mxu0 0
        %850 = vmatpush1.bf16.msra.mxu0 0
        %851 = vmatprep.mubr.bf16.mxu0 0
        %852 = vmatmul.mubr.bf16.gmra.mrb[0].mxu0 %v796
        %v853 = vpop.f32.mrb[0].mxu0
        %v854 = vadd.f32 %v770, %v853
        %v855 = vpop.f32.mrb[0].mxu0
        %v856 = vpop.f32.mrb[0].mxu0
        %v857 = vadd.f32 %v770, %v856
        %v858 = vpop.f32.mrb[0].mxu0
        %859 = vmatprep.mubr.bf16.mxu0 0
        %860 = vmatmul.mubr.bf16.gmra.mrb[0].mxu0 %v799
        %v861 = vpop.f32.mrb[0].mxu0
        %v862 = vadd.f32 %v770, %v861
        %v863 = vpop.f32.mrb[0].mxu0
        %v864 = vpop.f32.mrb[0].mxu0
        %v865 = vadd.f32 %v770, %v864
        %v866 = vpop.f32.mrb[0].mxu0
        %867 = vmatprep.mubr.bf16.mxu0 0
        %868 = vmatmul.mubr.bf16.gmra.mrb[0].mxu0 %v802
        %v869 = vpop.f32.mrb[0].mxu0
        %v870 = vadd.f32 %v770, %v869
        %v871 = vpop.f32.mrb[0].mxu0
        %v872 = vpop.f32.mrb[0].mxu0
        %v873 = vadd.f32 %v770, %v872
        %v874 = vpop.f32.mrb[0].mxu0
        %875 = vmatprep.mubr.bf16.mxu0 0
        %876 = vmatmul.mubr.bf16.gmra.mrb[0].mxu0 %v805
        %v877 = vpop.f32.mrb[0].mxu0
        %v878 = vadd.f32 %v770, %v877
        %v879 = vpop.f32.mrb[0].mxu0
        %v880 = vpop.f32.mrb[0].mxu0
        %v881 = vadd.f32 %v770, %v880
        %v882 = vpop.f32.mrb[0].mxu0
        %883 = vmatprep.mubr.bf16.mxu0 0
        %884 = vmatmul.mubr.bf16.gmra.mrb[0].mxu0 %v808
        %v885 = vpop.f32.mrb[0].mxu0
        %v886 = vadd.f32 %v770, %v885
        %v887 = vpop.f32.mrb[0].mxu0
        %v888 = vpop.f32.mrb[0].mxu0
        %v889 = vadd.f32 %v770, %v888
        %v890 = vpop.f32.mrb[0].mxu0
        %891 = vmatprep.mubr.bf16.mxu0 0
        %892 = vmatmul.mubr.bf16.gmra.mrb[0].mxu0 %v811
        %v893 = vpop.f32.mrb[0].mxu0
        %v894 = vadd.f32 %v770, %v893
        %v895 = vpop.f32.mrb[0].mxu0
        %v896 = vpop.f32.mrb[0].mxu0
        %v897 = vadd.f32 %v770, %v896
        %v898 = vpop.f32.mrb[0].mxu0
        %899 = vmatprep.mubr.bf16.mxu0 0
        %900 = vmatmul.mubr.bf16.gmra.mrb[0].mxu0 %v814
        %v901 = vpop.f32.mrb[0].mxu0
        %v902 = vadd.f32 %v770, %v901
        %v903 = vpop.f32.mrb[0].mxu0
        %v904 = vpop.f32.mrb[0].mxu0
        %v905 = vadd.f32 %v770, %v904
        %v906 = vpop.f32.mrb[0].mxu0
        %907 = vmatprep.mubr.bf16.mxu0 0
        %908 = vmatmul.mubr.bf16.gmra.mrb[0].mxu0 %v817
        %v909 = vpop.f32.mrb[0].mxu0
        %v910 = vadd.f32 %v770, %v909
        %v911 = vpop.f32.mrb[0].mxu0
        %v912 = vpop.f32.mrb[0].mxu0
        %v913 = vadd.f32 %v770, %v912
        %v914 = vpop.f32.mrb[0].mxu0
        %915 = vdwg.mxu0
        %v916 = vmul.f32 %v854, 0.5
        %v917 = vmul.f32 %v857, 0.5
        %v918 = vmul.f32 %v862, 0.5
        %v919 = vmul.f32 %v865, 0.5
        %v920 = vmul.f32 %v870, 0.5
        %v921 = vmul.f32 %v873, 0.5
        %v922 = vmul.f32 %v878, 0.5
        %v923 = vmul.f32 %v881, 0.5
        %v924 = vmul.f32 %v886, 0.5
        %v925 = vmul.f32 %v889, 0.5
        %v926 = vmul.f32 %v894, 0.5
        %v927 = vmul.f32 %v897, 0.5
        %v928 = vmul.f32 %v902, 0.5
        %v929 = vmul.f32 %v905, 0.5
        %v930 = vmul.f32 %v910, 0.5
        %v931 = vmul.f32 %v913, 0.5
        %v932 = vmul.f32 %v854, 0.70710677
        %v933 = vmul.f32 %v857, 0.70710677
        %v934 = vmul.f32 %v862, 0.70710677
        %v935 = vmul.f32 %v865, 0.70710677
        %v936 = vmul.f32 %v870, 0.70710677
        %v937 = vmul.f32 %v873, 0.70710677
        %v938 = vmul.f32 %v878, 0.70710677
        %v939 = vmul.f32 %v881, 0.70710677
        %v940 = vmul.f32 %v886, 0.70710677
        %v941 = vmul.f32 %v889, 0.70710677
        %v942 = vmul.f32 %v894, 0.70710677
        %v943 = vmul.f32 %v897, 0.70710677
        %v944 = vmul.f32 %v902, 0.70710677
        %v945 = vmul.f32 %v905, 0.70710677
        %v946 = vmul.f32 %v910, 0.70710677
        %v947 = vmul.f32 %v913, 0.70710677
        %v948 = verf.f32.pop %v932
        %v949 = verf.f32.pop %v933
        %v950 = verf.f32.pop %v934
        %v951 = verf.f32.pop %v935
        %v952 = verf.f32.pop %v936
        %v953 = verf.f32.pop %v937
        %v954 = verf.f32.pop %v938
        %v955 = verf.f32.pop %v939
        %v956 = verf.f32.pop %v940
        %v957 = verf.f32.pop %v941
        %v958 = verf.f32.pop %v942
        %v959 = verf.f32.pop %v943
        %v960 = verf.f32.pop %v944
        %v961 = verf.f32.pop %v945
        %v962 = verf.f32.pop %v946
        %v963 = verf.f32.pop %v947
        %v964 = vadd.f32 %v948, 1.0
        %v965 = vadd.f32 %v949, 1.0
        %v966 = vadd.f32 %v950, 1.0
        %v967 = vadd.f32 %v951, 1.0
        %v968 = vadd.f32 %v952, 1.0
        %v969 = vadd.f32 %v953, 1.0
        %v970 = vadd.f32 %v954, 1.0
        %v971 = vadd.f32 %v955, 1.0
        %v972 = vadd.f32 %v956, 1.0
        %v973 = vadd.f32 %v957, 1.0
        %v974 = vadd.f32 %v958, 1.0
        %v975 = vadd.f32 %v959, 1.0
        %v976 = vadd.f32 %v960, 1.0
        %v977 = vadd.f32 %v961, 1.0
        %v978 = vadd.f32 %v962, 1.0
        %v979 = vadd.f32 %v963, 1.0
        %v980 = vmul.f32 %v916, %v964
        %v981 = vmul.f32 %v917, %v965
        %v982 = vmul.f32 %v918, %v966
        %v983 = vmul.f32 %v919, %v967
        %v984 = vmul.f32 %v920, %v968
        %v985 = vmul.f32 %v921, %v969
        %v986 = vmul.f32 %v922, %v970
        %v987 = vmul.f32 %v923, %v971
        %v988 = vmul.f32 %v924, %v972
        %v989 = vmul.f32 %v925, %v973
        %v990 = vmul.f32 %v926, %v974
        %v991 = vmul.f32 %v927, %v975
        %v992 = vmul.f32 %v928, %v976
        %v993 = vmul.f32 %v929, %v977
        %v994 = vmul.f32 %v930, %v978
        %v995 = vmul.f32 %v931, %v979
        %v996 = vpack.c.bf16 %v981, %v980
        %v997 = vpack.c.bf16 %v983, %v982
        %v998 = vpack.c.bf16 %v985, %v984
        %v999 = vpack.c.bf16 %v987, %v986
        %v1000 = vpack.c.bf16 %v989, %v988
        %v1001 = vpack.c.bf16 %v991, %v990
        %v1002 = vpack.c.bf16 %v993, %v992
        %v1003 = vpack.c.bf16 %v995, %v994
        %v1004 = vld [vmem:[%s3] sm:$0xf]
        %v1005 = vld [vmem:[%s3 + $0x4] sm:$0xf]
        %v1006 = vld [vmem:[%s3 + $0x8] sm:$0xf]
        %v1007 = vld [vmem:[%s3 + $0xc] sm:$0xf]
        %v1008 = vlaneseq
        %v1009 = vshrl.u32 %v1008, 7
        %v1010 = vsub.s32 4, %v1009
        %v1011 = vrot.slane %v252, %v1010
        %v1016 = vunpack.c.l.b16 %v1004
        %v1017 = vunpack.c.l.b16 %v1005
        %v1018 = vunpack.c.l.b16 %v1006
        %v1019 = vunpack.c.l.b16 %v1007
        %v1020 = vpack.c.b16 %v1017, %v1016
        %v1021 = vpack.c.b16 %v1019, %v1018
        %v1025 = vsel %vm299, %v996, 0
        %v1028 = vsel %vm299, %v997, 0
        %v1031 = vsel %vm299, %v998, 0
        %v1034 = vsel %vm299, %v999, 0
        %v1037 = vsel %vm299, %v1000, 0
        %v1040 = vsel %vm299, %v1001, 0
        %v1043 = vsel %vm299, %v1002, 0
        %v1046 = vsel %vm299, %v1003, 0
        %1048 = vmatprep.subr.bf16.mxu0 0
        %1049 = vmatpush1.bf16.msra.mxu0 %v1020
        %1050 = vmatprep.subr.bf16.mxu0 0
        %1051 = vmatpush1.bf16.msra.mxu0 %v1021
        %1052 = vmatprep.subr.bf16.mxu0 0
        %1053 = vmatpush1.bf16.msra.mxu0 0
        %1054 = vmatprep.subr.bf16.mxu0 0
        %1055 = vmatpush1.bf16.msra.mxu0 0
        %1056 = vmatprep.subr.bf16.mxu0 0
        %1057 = vmatpush1.bf16.msra.mxu0 0
        %1058 = vmatprep.subr.bf16.mxu0 0
        %1059 = vmatpush1.bf16.msra.mxu0 0
        %1060 = vmatprep.subr.bf16.mxu0 0
        %1061 = vmatpush1.bf16.msra.mxu0 0
        %1062 = vmatprep.subr.bf16.mxu0 0
        %1063 = vmatpush1.bf16.msra.mxu0 0
        %1064 = vmatprep.subr.bf16.mxu0 0
        %1065 = vmatpush1.bf16.msra.mxu0 0
        %1066 = vmatprep.subr.bf16.mxu0 0
        %1067 = vmatpush1.bf16.msra.mxu0 0
        %1068 = vmatprep.subr.bf16.mxu0 0
        %1069 = vmatpush1.bf16.msra.mxu0 0
        %1070 = vmatprep.subr.bf16.mxu0 0
        %1071 = vmatpush1.bf16.msra.mxu0 0
        %1072 = vmatprep.subr.bf16.mxu0 0
        %1073 = vmatpush1.bf16.msra.mxu0 0
        %1074 = vmatprep.subr.bf16.mxu0 0
        %1075 = vmatpush1.bf16.msra.mxu0 0
        %1076 = vmatprep.subr.bf16.mxu0 0
        %1077 = vmatpush1.bf16.msra.mxu0 0
        %1078 = vmatprep.subr.bf16.mxu0 0
        %1079 = vmatpush1.bf16.msra.mxu0 0
        %1080 = vmatprep.mubr.bf16.mxu0 0
        %1081 = vmatmul.mubr.bf16.gmra.mrb[0].mxu0 %v1025
        %v1082 = vpop.f32.mrb[0].mxu0
        %v1083 = vadd.f32 %v1011, %v1082
        %v1084 = vpop.f32.mrb[0].mxu0
        %v1085 = vpop.f32.mrb[0].mxu0
        %v1086 = vadd.f32 %v1011, %v1085
        %v1087 = vpop.f32.mrb[0].mxu0
        %1088 = vmatprep.mubr.bf16.mxu0 0
        %1089 = vmatmul.mubr.bf16.gmra.mrb[0].mxu0 %v1028
        %v1090 = vpop.f32.mrb[0].mxu0
        %v1091 = vadd.f32 %v1011, %v1090
        %v1092 = vpop.f32.mrb[0].mxu0
        %v1093 = vpop.f32.mrb[0].mxu0
        %v1094 = vadd.f32 %v1011, %v1093
        %v1095 = vpop.f32.mrb[0].mxu0
        %1096 = vmatprep.mubr.bf16.mxu0 0
        %1097 = vmatmul.mubr.bf16.gmra.mrb[0].mxu0 %v1031
        %v1098 = vpop.f32.mrb[0].mxu0
        %v1099 = vadd.f32 %v1011, %v1098
        %v1100 = vpop.f32.mrb[0].mxu0
        %v1101 = vpop.f32.mrb[0].mxu0
        %v1102 = vadd.f32 %v1011, %v1101
        %v1103 = vpop.f32.mrb[0].mxu0
        %1104 = vmatprep.mubr.bf16.mxu0 0
        %1105 = vmatmul.mubr.bf16.gmra.mrb[0].mxu0 %v1034
        %v1106 = vpop.f32.mrb[0].mxu0
        %v1107 = vadd.f32 %v1011, %v1106
        %v1108 = vpop.f32.mrb[0].mxu0
        %v1109 = vpop.f32.mrb[0].mxu0
        %v1110 = vadd.f32 %v1011, %v1109
        %v1111 = vpop.f32.mrb[0].mxu0
        %1112 = vmatprep.mubr.bf16.mxu0 0
        %1113 = vmatmul.mubr.bf16.gmra.mrb[0].mxu0 %v1037
        %v1114 = vpop.f32.mrb[0].mxu0
        %v1115 = vadd.f32 %v1011, %v1114
        %v1116 = vpop.f32.mrb[0].mxu0
        %v1117 = vpop.f32.mrb[0].mxu0
        %v1118 = vadd.f32 %v1011, %v1117
        %v1119 = vpop.f32.mrb[0].mxu0
        %1120 = vmatprep.mubr.bf16.mxu0 0
        %1121 = vmatmul.mubr.bf16.gmra.mrb[0].mxu0 %v1040
        %v1122 = vpop.f32.mrb[0].mxu0
        %v1123 = vadd.f32 %v1011, %v1122
        %v1124 = vpop.f32.mrb[0].mxu0
        %v1125 = vpop.f32.mrb[0].mxu0
        %v1126 = vadd.f32 %v1011, %v1125
        %v1127 = vpop.f32.mrb[0].mxu0
        %1128 = vmatprep.mubr.bf16.mxu0 0
        %1129 = vmatmul.mubr.bf16.gmra.mrb[0].mxu0 %v1043
        %v1130 = vpop.f32.mrb[0].mxu0
        %v1131 = vadd.f32 %v1011, %v1130
        %v1132 = vpop.f32.mrb[0].mxu0
        %v1133 = vpop.f32.mrb[0].mxu0
        %v1134 = vadd.f32 %v1011, %v1133
        %v1135 = vpop.f32.mrb[0].mxu0
        %1136 = vmatprep.mubr.bf16.mxu0 0
        %1137 = vmatmul.mubr.bf16.gmra.mrb[0].mxu0 %v1046
        %v1138 = vpop.f32.mrb[0].mxu0
        %v1139 = vadd.f32 %v1011, %v1138
        %v1140 = vpop.f32.mrb[0].mxu0
        %v1141 = vpop.f32.mrb[0].mxu0
        %v1142 = vadd.f32 %v1011, %v1141
        %v1143 = vpop.f32.mrb[0].mxu0
        %1144 = vdwg.mxu0
        %v1145 = vadd.f32 %v980, %v1083
        %v1146 = vadd.f32 %v981, %v1086
        %v1147 = vadd.f32 %v982, %v1091
        %v1148 = vadd.f32 %v983, %v1094
        %v1149 = vadd.f32 %v984, %v1099
        %v1150 = vadd.f32 %v985, %v1102
        %v1151 = vadd.f32 %v986, %v1107
        %v1152 = vadd.f32 %v987, %v1110
        %v1153 = vadd.f32 %v988, %v1115
        %v1154 = vadd.f32 %v989, %v1118
        %v1155 = vadd.f32 %v990, %v1123
        %v1156 = vadd.f32 %v991, %v1126
        %v1157 = vadd.f32 %v992, %v1131
        %v1158 = vadd.f32 %v993, %v1134
        %v1159 = vadd.f32 %v994, %v1139
        %v1160 = vadd.f32 %v995, %v1142
        %v1161 = vsel %vm299, %v1145, 0.0
        %1162 = vadd.xlane.f32.xlu0 %v1161
        %v1163 = vpop.xlane.xlu0 %1162
        %v1164 = vsel %vm299, %v1146, 0.0
        %1165 = vadd.xlane.f32.xlu0 %v1164
        %v1166 = vpop.xlane.xlu0 %1165
        %v1167 = vsel %vm299, %v1147, 0.0
        %1168 = vadd.xlane.f32.xlu0 %v1167
        %v1169 = vpop.xlane.xlu0 %1168
        %v1170 = vsel %vm299, %v1148, 0.0
        %1171 = vadd.xlane.f32.xlu0 %v1170
        %v1172 = vpop.xlane.xlu0 %1171
        %v1173 = vsel %vm299, %v1149, 0.0
        %1174 = vadd.xlane.f32.xlu0 %v1173
        %v1175 = vpop.xlane.xlu0 %1174
        %v1176 = vsel %vm299, %v1150, 0.0
        %1177 = vadd.xlane.f32.xlu0 %v1176
        %v1178 = vpop.xlane.xlu0 %1177
        %v1179 = vsel %vm299, %v1151, 0.0
        %1180 = vadd.xlane.f32.xlu0 %v1179
        %v1181 = vpop.xlane.xlu0 %1180
        %v1182 = vsel %vm299, %v1152, 0.0
        %1183 = vadd.xlane.f32.xlu0 %v1182
        %v1184 = vpop.xlane.xlu0 %1183
        %v1185 = vsel %vm299, %v1153, 0.0
        %1186 = vadd.xlane.f32.xlu0 %v1185
        %v1187 = vpop.xlane.xlu0 %1186
        %v1188 = vsel %vm299, %v1154, 0.0
        %1189 = vadd.xlane.f32.xlu0 %v1188
        %v1190 = vpop.xlane.xlu0 %1189
        %v1191 = vsel %vm299, %v1155, 0.0
        %1192 = vadd.xlane.f32.xlu0 %v1191
        %v1193 = vpop.xlane.xlu0 %1192
        %v1194 = vsel %vm299, %v1156, 0.0
        %1195 = vadd.xlane.f32.xlu0 %v1194
        %v1196 = vpop.xlane.xlu0 %1195
        %v1197 = vsel %vm299, %v1157, 0.0
        %1198 = vadd.xlane.f32.xlu0 %v1197
        %v1199 = vpop.xlane.xlu0 %1198
        %v1200 = vsel %vm299, %v1158, 0.0
        %1201 = vadd.xlane.f32.xlu0 %v1200
        %v1202 = vpop.xlane.xlu0 %1201
        %v1203 = vsel %vm299, %v1159, 0.0
        %1204 = vadd.xlane.f32.xlu0 %v1203
        %v1205 = vpop.xlane.xlu0 %1204
        %v1206 = vsel %vm299, %v1160, 0.0
        %1207 = vadd.xlane.f32.xlu0 %v1206
        %v1208 = vpop.xlane.xlu0 %1207
        %v1209 = vrcp.pop 32.0
        %v1210 = vmul.f32 %v1163, %v1209
        %v1211 = vmul.f32 %v1166, %v1209
        %v1212 = vmul.f32 %v1169, %v1209
        %v1213 = vmul.f32 %v1172, %v1209
        %v1214 = vmul.f32 %v1175, %v1209
        %v1215 = vmul.f32 %v1178, %v1209
        %v1216 = vmul.f32 %v1181, %v1209
        %v1217 = vmul.f32 %v1184, %v1209
        %v1218 = vmul.f32 %v1187, %v1209
        %v1219 = vmul.f32 %v1190, %v1209
        %v1220 = vmul.f32 %v1193, %v1209
        %v1221 = vmul.f32 %v1196, %v1209
        %v1222 = vmul.f32 %v1199, %v1209
        %v1223 = vmul.f32 %v1202, %v1209
        %v1224 = vmul.f32 %v1205, %v1209
        %v1225 = vmul.f32 %v1208, %v1209
        %v1226 = vsub.f32 %v1145, %v1210
        %v1227 = vsub.f32 %v1146, %v1211
        %v1228 = vsub.f32 %v1147, %v1212
        %v1229 = vsub.f32 %v1148, %v1213
        %v1230 = vsub.f32 %v1149, %v1214
        %v1231 = vsub.f32 %v1150, %v1215
        %v1232 = vsub.f32 %v1151, %v1216
        %v1233 = vsub.f32 %v1152, %v1217
        %v1234 = vsub.f32 %v1153, %v1218
        %v1235 = vsub.f32 %v1154, %v1219
        %v1236 = vsub.f32 %v1155, %v1220
        %v1237 = vsub.f32 %v1156, %v1221
        %v1238 = vsub.f32 %v1157, %v1222
        %v1239 = vsub.f32 %v1158, %v1223
        %v1240 = vsub.f32 %v1159, %v1224
        %v1241 = vsub.f32 %v1160, %v1225
        %v1242 = vmul.f32 %v1226, %v1226
        %v1243 = vmul.f32 %v1227, %v1227
        %v1244 = vmul.f32 %v1228, %v1228
        %v1245 = vmul.f32 %v1229, %v1229
        %v1246 = vmul.f32 %v1230, %v1230
        %v1247 = vmul.f32 %v1231, %v1231
        %v1248 = vmul.f32 %v1232, %v1232
        %v1249 = vmul.f32 %v1233, %v1233
        %v1250 = vmul.f32 %v1234, %v1234
        %v1251 = vmul.f32 %v1235, %v1235
        %v1252 = vmul.f32 %v1236, %v1236
        %v1253 = vmul.f32 %v1237, %v1237
        %v1254 = vmul.f32 %v1238, %v1238
        %v1255 = vmul.f32 %v1239, %v1239
        %v1256 = vmul.f32 %v1240, %v1240
        %v1257 = vmul.f32 %v1241, %v1241
        %v1258 = vsel %vm299, %v1242, 0.0
        %1259 = vadd.xlane.f32.xlu0 %v1258
        %v1260 = vpop.xlane.xlu0 %1259
        %v1261 = vsel %vm299, %v1243, 0.0
        %1262 = vadd.xlane.f32.xlu0 %v1261
        %v1263 = vpop.xlane.xlu0 %1262
        %v1264 = vsel %vm299, %v1244, 0.0
        %1265 = vadd.xlane.f32.xlu0 %v1264
        %v1266 = vpop.xlane.xlu0 %1265
        %v1267 = vsel %vm299, %v1245, 0.0
        %1268 = vadd.xlane.f32.xlu0 %v1267
        %v1269 = vpop.xlane.xlu0 %1268
        %v1270 = vsel %vm299, %v1246, 0.0
        %1271 = vadd.xlane.f32.xlu0 %v1270
        %v1272 = vpop.xlane.xlu0 %1271
        %v1273 = vsel %vm299, %v1247, 0.0
        %1274 = vadd.xlane.f32.xlu0 %v1273
        %v1275 = vpop.xlane.xlu0 %1274
        %v1276 = vsel %vm299, %v1248, 0.0
        %1277 = vadd.xlane.f32.xlu0 %v1276
        %v1278 = vpop.xlane.xlu0 %1277
        %v1279 = vsel %vm299, %v1249, 0.0
        %1280 = vadd.xlane.f32.xlu0 %v1279
        %v1281 = vpop.xlane.xlu0 %1280
        %v1282 = vsel %vm299, %v1250, 0.0
        %1283 = vadd.xlane.f32.xlu0 %v1282
        %v1284 = vpop.xlane.xlu0 %1283
        %v1285 = vsel %vm299, %v1251, 0.0
        %1286 = vadd.xlane.f32.xlu0 %v1285
        %v1287 = vpop.xlane.xlu0 %1286
        %v1288 = vsel %vm299, %v1252, 0.0
        %1289 = vadd.xlane.f32.xlu0 %v1288
        %v1290 = vpop.xlane.xlu0 %1289
        %v1291 = vsel %vm299, %v1253, 0.0
        %1292 = vadd.xlane.f32.xlu0 %v1291
        %v1293 = vpop.xlane.xlu0 %1292
        %v1294 = vsel %vm299, %v1254, 0.0
        %1295 = vadd.xlane.f32.xlu0 %v1294
        %v1296 = vpop.xlane.xlu0 %1295
        %v1297 = vsel %vm299, %v1255, 0.0
        %1298 = vadd.xlane.f32.xlu0 %v1297
        %v1299 = vpop.xlane.xlu0 %1298
        %v1300 = vsel %vm299, %v1256, 0.0
        %1301 = vadd.xlane.f32.xlu0 %v1300
        %v1302 = vpop.xlane.xlu0 %1301
        %v1303 = vsel %vm299, %v1257, 0.0
        %1304 = vadd.xlane.f32.xlu0 %v1303
        %v1305 = vpop.xlane.xlu0 %1304
        %v1306 = vmul.f32 %v1260, %v1209
        %v1307 = vmul.f32 %v1263, %v1209
        %v1308 = vmul.f32 %v1266, %v1209
        %v1309 = vmul.f32 %v1269, %v1209
        %v1310 = vmul.f32 %v1272, %v1209
        %v1311 = vmul.f32 %v1275, %v1209
        %v1312 = vmul.f32 %v1278, %v1209
        %v1313 = vmul.f32 %v1281, %v1209
        %v1314 = vmul.f32 %v1284, %v1209
        %v1315 = vmul.f32 %v1287, %v1209
        %v1316 = vmul.f32 %v1290, %v1209
        %v1317 = vmul.f32 %v1293, %v1209
        %v1318 = vmul.f32 %v1296, %v1209
        %v1319 = vmul.f32 %v1299, %v1209
        %v1320 = vmul.f32 %v1302, %v1209
        %v1321 = vmul.f32 %v1305, %v1209
        %v1322 = vadd.f32 %v1306, 1e-05
        %v1323 = vadd.f32 %v1307, 1e-05
        %v1324 = vadd.f32 %v1308, 1e-05
        %v1325 = vadd.f32 %v1309, 1e-05
        %v1326 = vadd.f32 %v1310, 1e-05
        %v1327 = vadd.f32 %v1311, 1e-05
        %v1328 = vadd.f32 %v1312, 1e-05
        %v1329 = vadd.f32 %v1313, 1e-05
        %v1330 = vadd.f32 %v1314, 1e-05
        %v1331 = vadd.f32 %v1315, 1e-05
        %v1332 = vadd.f32 %v1316, 1e-05
        %v1333 = vadd.f32 %v1317, 1e-05
        %v1334 = vadd.f32 %v1318, 1e-05
        %v1335 = vadd.f32 %v1319, 1e-05
        %v1336 = vadd.f32 %v1320, 1e-05
        %v1337 = vadd.f32 %v1321, 1e-05
        %v1338 = vrsqrt.pop %v1322
        %v1339 = vrsqrt.pop %v1323
        %v1340 = vrsqrt.pop %v1324
        %v1341 = vrsqrt.pop %v1325
        %v1342 = vrsqrt.pop %v1326
        %v1343 = vrsqrt.pop %v1327
        %v1344 = vrsqrt.pop %v1328
        %v1345 = vrsqrt.pop %v1329
        %v1346 = vrsqrt.pop %v1330
        %v1347 = vrsqrt.pop %v1331
        %v1348 = vrsqrt.pop %v1332
        %v1349 = vrsqrt.pop %v1333
        %v1350 = vrsqrt.pop %v1334
        %v1351 = vrsqrt.pop %v1335
        %v1352 = vrsqrt.pop %v1336
        %v1353 = vrsqrt.pop %v1337
        %v1354 = vmul.f32 %v1226, %v1338
        %v1355 = vmul.f32 %v1227, %v1339
        %v1356 = vmul.f32 %v1228, %v1340
        %v1357 = vmul.f32 %v1229, %v1341
        %v1358 = vmul.f32 %v1230, %v1342
        %v1359 = vmul.f32 %v1231, %v1343
        %v1360 = vmul.f32 %v1232, %v1344
        %v1361 = vmul.f32 %v1233, %v1345
        %v1362 = vmul.f32 %v1234, %v1346
        %v1363 = vmul.f32 %v1235, %v1347
        %v1364 = vmul.f32 %v1236, %v1348
        %v1365 = vmul.f32 %v1237, %v1349
        %v1366 = vmul.f32 %v1238, %v1350
        %v1367 = vmul.f32 %v1239, %v1351
        %v1368 = vmul.f32 %v1240, %v1352
        %v1369 = vmul.f32 %v1241, %v1353
        %v1370 = vlaneseq
        %v1371 = vshrl.u32 %v1370, 7
        %v1372 = vsub.s32 5, %v1371
        %v1373 = vrot.slane %v252, %v1372
        %v1374 = vmul.f32 %v1354, %v1373
        %v1375 = vmul.f32 %v1355, %v1373
        %v1376 = vmul.f32 %v1356, %v1373
        %v1377 = vmul.f32 %v1357, %v1373
        %v1378 = vmul.f32 %v1358, %v1373
        %v1379 = vmul.f32 %v1359, %v1373
        %v1380 = vmul.f32 %v1360, %v1373
        %v1381 = vmul.f32 %v1361, %v1373
        %v1382 = vmul.f32 %v1362, %v1373
        %v1383 = vmul.f32 %v1363, %v1373
        %v1384 = vmul.f32 %v1364, %v1373
        %v1385 = vmul.f32 %v1365, %v1373
        %v1386 = vmul.f32 %v1366, %v1373
        %v1387 = vmul.f32 %v1367, %v1373
        %v1388 = vmul.f32 %v1368, %v1373
        %v1389 = vmul.f32 %v1369, %v1373
        %v1390 = vlaneseq
        %v1391 = vshrl.u32 %v1390, 7
        %v1392 = vsub.s32 6, %v1391
        %v1393 = vrot.slane %v252, %v1392
        %v1394 = vadd.f32 %v1374, %v1393
        %v1395 = vadd.f32 %v1375, %v1393
        %v1396 = vadd.f32 %v1376, %v1393
        %v1397 = vadd.f32 %v1377, %v1393
        %v1398 = vadd.f32 %v1378, %v1393
        %v1399 = vadd.f32 %v1379, %v1393
        %v1400 = vadd.f32 %v1380, %v1393
        %v1401 = vadd.f32 %v1381, %v1393
        %v1402 = vadd.f32 %v1382, %v1393
        %v1403 = vadd.f32 %v1383, %v1393
        %v1404 = vadd.f32 %v1384, %v1393
        %v1405 = vadd.f32 %v1385, %v1393
        %v1406 = vadd.f32 %v1386, %v1393
        %v1407 = vadd.f32 %v1387, %v1393
        %v1408 = vadd.f32 %v1388, %v1393
        %v1409 = vadd.f32 %v1389, %v1393
        %v1410 = vpack.c.bf16 %v1395, %v1394
        %v1411 = vpack.c.bf16 %v1397, %v1396
        %v1412 = vpack.c.bf16 %v1399, %v1398
        %v1413 = vpack.c.bf16 %v1401, %v1400
        %v1414 = vpack.c.bf16 %v1403, %v1402
        %v1415 = vpack.c.bf16 %v1405, %v1404
        %v1416 = vpack.c.bf16 %v1407, %v1406
        %v1417 = vpack.c.bf16 %v1409, %v1408
        %v1418 = vld [vmem:[%s4] sm:$0xf]
        %v1419 = vld [vmem:[%s4 + $0x4] sm:$0xf]
        %v1420 = vld [vmem:[%s4 + $0x8] sm:$0xf]
        %v1421 = vld [vmem:[%s4 + $0xc] sm:$0xf]
        %v1422 = vlaneseq
        %v1423 = vshrl.u32 %v1422, 7
        %v1424 = vsub.s32 7, %v1423
        %v1425 = vrot.slane %v252, %v1424
        %v1430 = vunpack.c.l.b16 %v1418
        %v1431 = vunpack.c.l.b16 %v1419
        %v1432 = vunpack.c.l.b16 %v1420
        %v1433 = vunpack.c.l.b16 %v1421
        %v1434 = vpack.c.b16 %v1431, %v1430
        %v1435 = vpack.c.b16 %v1433, %v1432
        %v1439 = vsel %vm299, %v1410, 0
        %v1442 = vsel %vm299, %v1411, 0
        %v1445 = vsel %vm299, %v1412, 0
        %v1448 = vsel %vm299, %v1413, 0
        %v1451 = vsel %vm299, %v1414, 0
        %v1454 = vsel %vm299, %v1415, 0
        %v1457 = vsel %vm299, %v1416, 0
        %v1460 = vsel %vm299, %v1417, 0
        %1462 = vmatprep.subr.bf16.mxu0 0
        %1463 = vmatpush1.bf16.msra.mxu0 %v1434
        %1464 = vmatprep.subr.bf16.mxu0 0
        %1465 = vmatpush1.bf16.msra.mxu0 %v1435
        %1466 = vmatprep.subr.bf16.mxu0 0
        %1467 = vmatpush1.bf16.msra.mxu0 0
        %1468 = vmatprep.subr.bf16.mxu0 0
        %1469 = vmatpush1.bf16.msra.mxu0 0
        %1470 = vmatprep.subr.bf16.mxu0 0
        %1471 = vmatpush1.bf16.msra.mxu0 0
        %1472 = vmatprep.subr.bf16.mxu0 0
        %1473 = vmatpush1.bf16.msra.mxu0 0
        %1474 = vmatprep.subr.bf16.mxu0 0
        %1475 = vmatpush1.bf16.msra.mxu0 0
        %1476 = vmatprep.subr.bf16.mxu0 0
        %1477 = vmatpush1.bf16.msra.mxu0 0
        %1478 = vmatprep.subr.bf16.mxu0 0
        %1479 = vmatpush1.bf16.msra.mxu0 0
        %1480 = vmatprep.subr.bf16.mxu0 0
        %1481 = vmatpush1.bf16.msra.mxu0 0
        %1482 = vmatprep.subr.bf16.mxu0 0
        %1483 = vmatpush1.bf16.msra.mxu0 0
        %1484 = vmatprep.subr.bf16.mxu0 0
        %1485 = vmatpush1.bf16.msra.mxu0 0
        %1486 = vmatprep.subr.bf16.mxu0 0
        %1487 = vmatpush1.bf16.msra.mxu0 0
        %1488 = vmatprep.subr.bf16.mxu0 0
        %1489 = vmatpush1.bf16.msra.mxu0 0
        %1490 = vmatprep.subr.bf16.mxu0 0
        %1491 = vmatpush1.bf16.msra.mxu0 0
        %1492 = vmatprep.subr.bf16.mxu0 0
        %1493 = vmatpush1.bf16.msra.mxu0 0
        %1494 = vmatprep.mubr.bf16.mxu0 0
        %1495 = vmatmul.mubr.bf16.gmra.mrb[0].mxu0 %v1439
        %v1496 = vpop.f32.mrb[0].mxu0
        %v1497 = vadd.f32 %v1425, %v1496
        %v1498 = vpop.f32.mrb[0].mxu0
        %v1499 = vpop.f32.mrb[0].mxu0
        %v1500 = vadd.f32 %v1425, %v1499
        %v1501 = vpop.f32.mrb[0].mxu0
        %1502 = vmatprep.mubr.bf16.mxu0 0
        %1503 = vmatmul.mubr.bf16.gmra.mrb[0].mxu0 %v1442
        %v1504 = vpop.f32.mrb[0].mxu0
        %v1505 = vadd.f32 %v1425, %v1504
        %v1506 = vpop.f32.mrb[0].mxu0
        %v1507 = vpop.f32.mrb[0].mxu0
        %v1508 = vadd.f32 %v1425, %v1507
        %v1509 = vpop.f32.mrb[0].mxu0
        %1510 = vmatprep.mubr.bf16.mxu0 0
        %1511 = vmatmul.mubr.bf16.gmra.mrb[0].mxu0 %v1445
        %v1512 = vpop.f32.mrb[0].mxu0
        %v1513 = vadd.f32 %v1425, %v1512
        %v1514 = vpop.f32.mrb[0].mxu0
        %v1515 = vpop.f32.mrb[0].mxu0
        %v1516 = vadd.f32 %v1425, %v1515
        %v1517 = vpop.f32.mrb[0].mxu0
        %1518 = vmatprep.mubr.bf16.mxu0 0
        %1519 = vmatmul.mubr.bf16.gmra.mrb[0].mxu0 %v1448
        %v1520 = vpop.f32.mrb[0].mxu0
        %v1521 = vadd.f32 %v1425, %v1520
        %v1522 = vpop.f32.mrb[0].mxu0
        %v1523 = vpop.f32.mrb[0].mxu0
        %v1524 = vadd.f32 %v1425, %v1523
        %v1525 = vpop.f32.mrb[0].mxu0
        %1526 = vmatprep.mubr.bf16.mxu0 0
        %1527 = vmatmul.mubr.bf16.gmra.mrb[0].mxu0 %v1451
        %v1528 = vpop.f32.mrb[0].mxu0
        %v1529 = vadd.f32 %v1425, %v1528
        %v1530 = vpop.f32.mrb[0].mxu0
        %v1531 = vpop.f32.mrb[0].mxu0
        %v1532 = vadd.f32 %v1425, %v1531
        %v1533 = vpop.f32.mrb[0].mxu0
        %1534 = vmatprep.mubr.bf16.mxu0 0
        %1535 = vmatmul.mubr.bf16.gmra.mrb[0].mxu0 %v1454
        %v1536 = vpop.f32.mrb[0].mxu0
        %v1537 = vadd.f32 %v1425, %v1536
        %v1538 = vpop.f32.mrb[0].mxu0
        %v1539 = vpop.f32.mrb[0].mxu0
        %v1540 = vadd.f32 %v1425, %v1539
        %v1541 = vpop.f32.mrb[0].mxu0
        %1542 = vmatprep.mubr.bf16.mxu0 0
        %1543 = vmatmul.mubr.bf16.gmra.mrb[0].mxu0 %v1457
        %v1544 = vpop.f32.mrb[0].mxu0
        %v1545 = vadd.f32 %v1425, %v1544
        %v1546 = vpop.f32.mrb[0].mxu0
        %v1547 = vpop.f32.mrb[0].mxu0
        %v1548 = vadd.f32 %v1425, %v1547
        %v1549 = vpop.f32.mrb[0].mxu0
        %1550 = vmatprep.mubr.bf16.mxu0 0
        %1551 = vmatmul.mubr.bf16.gmra.mrb[0].mxu0 %v1460
        %v1552 = vpop.f32.mrb[0].mxu0
        %v1553 = vadd.f32 %v1425, %v1552
        %v1554 = vpop.f32.mrb[0].mxu0
        %v1555 = vpop.f32.mrb[0].mxu0
        %v1556 = vadd.f32 %v1425, %v1555
        %v1557 = vpop.f32.mrb[0].mxu0
        %1558 = vdwg.mxu0
        %v1559 = vmul.f32 %v1497, 0.5
        %v1560 = vmul.f32 %v1500, 0.5
        %v1561 = vmul.f32 %v1505, 0.5
        %v1562 = vmul.f32 %v1508, 0.5
        %v1563 = vmul.f32 %v1513, 0.5
        %v1564 = vmul.f32 %v1516, 0.5
        %v1565 = vmul.f32 %v1521, 0.5
        %v1566 = vmul.f32 %v1524, 0.5
        %v1567 = vmul.f32 %v1529, 0.5
        %v1568 = vmul.f32 %v1532, 0.5
        %v1569 = vmul.f32 %v1537, 0.5
        %v1570 = vmul.f32 %v1540, 0.5
        %v1571 = vmul.f32 %v1545, 0.5
        %v1572 = vmul.f32 %v1548, 0.5
        %v1573 = vmul.f32 %v1553, 0.5
        %v1574 = vmul.f32 %v1556, 0.5
        %v1575 = vmul.f32 %v1497, 0.70710677
        %v1576 = vmul.f32 %v1500, 0.70710677
        %v1577 = vmul.f32 %v1505, 0.70710677
        %v1578 = vmul.f32 %v1508, 0.70710677
        %v1579 = vmul.f32 %v1513, 0.70710677
        %v1580 = vmul.f32 %v1516, 0.70710677
        %v1581 = vmul.f32 %v1521, 0.70710677
        %v1582 = vmul.f32 %v1524, 0.70710677
        %v1583 = vmul.f32 %v1529, 0.70710677
        %v1584 = vmul.f32 %v1532, 0.70710677
        %v1585 = vmul.f32 %v1537, 0.70710677
        %v1586 = vmul.f32 %v1540, 0.70710677
        %v1587 = vmul.f32 %v1545, 0.70710677
        %v1588 = vmul.f32 %v1548, 0.70710677
        %v1589 = vmul.f32 %v1553, 0.70710677
        %v1590 = vmul.f32 %v1556, 0.70710677
        %v1591 = verf.f32.pop %v1575
        %v1592 = verf.f32.pop %v1576
        %v1593 = verf.f32.pop %v1577
        %v1594 = verf.f32.pop %v1578
        %v1595 = verf.f32.pop %v1579
        %v1596 = verf.f32.pop %v1580
        %v1597 = verf.f32.pop %v1581
        %v1598 = verf.f32.pop %v1582
        %v1599 = verf.f32.pop %v1583
        %v1600 = verf.f32.pop %v1584
        %v1601 = verf.f32.pop %v1585
        %v1602 = verf.f32.pop %v1586
        %v1603 = verf.f32.pop %v1587
        %v1604 = verf.f32.pop %v1588
        %v1605 = verf.f32.pop %v1589
        %v1606 = verf.f32.pop %v1590
        %v1607 = vadd.f32 %v1591, 1.0
        %v1608 = vadd.f32 %v1592, 1.0
        %v1609 = vadd.f32 %v1593, 1.0
        %v1610 = vadd.f32 %v1594, 1.0
        %v1611 = vadd.f32 %v1595, 1.0
        %v1612 = vadd.f32 %v1596, 1.0
        %v1613 = vadd.f32 %v1597, 1.0
        %v1614 = vadd.f32 %v1598, 1.0
        %v1615 = vadd.f32 %v1599, 1.0
        %v1616 = vadd.f32 %v1600, 1.0
        %v1617 = vadd.f32 %v1601, 1.0
        %v1618 = vadd.f32 %v1602, 1.0
        %v1619 = vadd.f32 %v1603, 1.0
        %v1620 = vadd.f32 %v1604, 1.0
        %v1621 = vadd.f32 %v1605, 1.0
        %v1622 = vadd.f32 %v1606, 1.0
        %v1623 = vmul.f32 %v1559, %v1607
        %v1624 = vmul.f32 %v1560, %v1608
        %v1625 = vmul.f32 %v1561, %v1609
        %v1626 = vmul.f32 %v1562, %v1610
        %v1627 = vmul.f32 %v1563, %v1611
        %v1628 = vmul.f32 %v1564, %v1612
        %v1629 = vmul.f32 %v1565, %v1613
        %v1630 = vmul.f32 %v1566, %v1614
        %v1631 = vmul.f32 %v1567, %v1615
        %v1632 = vmul.f32 %v1568, %v1616
        %v1633 = vmul.f32 %v1569, %v1617
        %v1634 = vmul.f32 %v1570, %v1618
        %v1635 = vmul.f32 %v1571, %v1619
        %v1636 = vmul.f32 %v1572, %v1620
        %v1637 = vmul.f32 %v1573, %v1621
        %v1638 = vmul.f32 %v1574, %v1622
        %v1639 = vpack.c.bf16 %v1624, %v1623
        %v1640 = vpack.c.bf16 %v1626, %v1625
        %v1641 = vpack.c.bf16 %v1628, %v1627
        %v1642 = vpack.c.bf16 %v1630, %v1629
        %v1643 = vpack.c.bf16 %v1632, %v1631
        %v1644 = vpack.c.bf16 %v1634, %v1633
        %v1645 = vpack.c.bf16 %v1636, %v1635
        %v1646 = vpack.c.bf16 %v1638, %v1637
        %vm1647 = vcmask 130048
        %v1649 = vsel %vm1647, %v254, 0
        %v1652 = vsel %vm1647, %v1639, 0
        %v1655 = vsel %vm1647, %v1640, 0
        %v1658 = vsel %vm1647, %v1641, 0
        %v1661 = vsel %vm1647, %v1642, 0
        %v1664 = vsel %vm1647, %v1643, 0
        %v1667 = vsel %vm1647, %v1644, 0
        %v1670 = vsel %vm1647, %v1645, 0
        %v1673 = vsel %vm1647, %v1646, 0
        %1675 = vmatprep.subr.bf16.mxu0 0
        %1676 = vmatpush1.bf16.xpose.msra.mxu0 %v1652
        %1677 = vmatprep.subr.bf16.mxu0 0
        %1678 = vmatpush1.bf16.xpose.msra.mxu0 %v1655
        %1679 = vmatprep.subr.bf16.mxu0 0
        %1680 = vmatpush1.bf16.xpose.msra.mxu0 %v1658
        %1681 = vmatprep.subr.bf16.mxu0 0
        %1682 = vmatpush1.bf16.xpose.msra.mxu0 %v1661
        %1683 = vmatprep.subr.bf16.mxu0 0
        %1684 = vmatpush1.bf16.xpose.msra.mxu0 %v1664
        %1685 = vmatprep.subr.bf16.mxu0 0
        %1686 = vmatpush1.bf16.xpose.msra.mxu0 %v1667
        %1687 = vmatprep.subr.bf16.mxu0 0
        %1688 = vmatpush1.bf16.xpose.msra.mxu0 %v1670
        %1689 = vmatprep.subr.bf16.mxu0 0
        %1690 = vmatpush1.bf16.xpose.msra.mxu0 %v1673
        %1691 = vmatprep.subr.bf16.mxu0 0
        %1692 = vmatpush1.bf16.xpose.msra.mxu0 0
        %1693 = vmatprep.subr.bf16.mxu0 0
        %1694 = vmatpush1.bf16.xpose.msra.mxu0 0
        %1695 = vmatprep.subr.bf16.mxu0 0
        %1696 = vmatpush1.bf16.xpose.msra.mxu0 0
        %1697 = vmatprep.subr.bf16.mxu0 0
        %1698 = vmatpush1.bf16.xpose.msra.mxu0 0
        %1699 = vmatprep.subr.bf16.mxu0 0
        %1700 = vmatpush1.bf16.xpose.msra.mxu0 0
        %1701 = vmatprep.subr.bf16.mxu0 0
        %1702 = vmatpush1.bf16.xpose.msra.mxu0 0
        %1703 = vmatprep.subr.bf16.mxu0 0
        %1704 = vmatpush1.bf16.xpose.msra.mxu0 0
        %1705 = vmatprep.subr.bf16.mxu0 0
        %1706 = vmatpush1.bf16.xpose.msra.mxu0 0
        %1707 = vmatprep.mubr.bf16.mxu0 0
        %1708 = vmatmul.mubr.bf16.gmra.mrb[0].mxu0 %v1649
        %v1709 = vpop.f32.mrb[0].mxu0
        %v1710 = vadd.f32 0.0, %v1709
        %v1711 = vpop.f32.mrb[0].mxu0
        %v1712 = vpop.f32.mrb[0].mxu0
        %v1713 = vpop.f32.mrb[0].mxu0
        %1714 = vdwg.mxu0
        %1716 = vset.pattern.permute.xlu0 16
        %1717 = vperm.xlu0 %1716, %v252
        %v1718 = vpop.permute.xlu0 %1717
        %v1719 = vrot.slane %v1718, 7
        %v1721 = vadd.f32 %v1710, %v1719
        %1722 = vst [vmem:[%s244] sm:$0x1] %v1721
        %s1723 = sand.u32 %s159, 1
        %s1724 = scalar_lea.sflag [#allocation3], %s1723
        %s1725 = sand.u32 %s159, 1
        %s1726 = scalar_lea.vmem [#allocation2], %s1725
        // Predicated region
        $region45: #{tpu_custom_call.1} parent=43 // pred_check
          %p1727 = pneg %p169
        $region46: #{tpu_custom_call.1} parent=43 // pred_check_branch
          %1729 = sbr.rel (%p1727) target = $region48
        $region47: #{tpu_custom_call.1} parent=43 // pred_region
          %s1731 = ssub.s32 16, 16
          %1732 = vsyncadd %s1724, %s1731
          %s1733 = smul.addr %s20, 16
          %s1734 = scalar_lea.hbm %s6, %s1733
          %s1736 = sshll.u32 %s1726, 4
          %s1737 = int_to_ptr.vmem [resolvable:$true] %s1736
          %1739 = dma.vmem_to_hbm [thread:$0]  %s1737, 16, %s1734, %s1724
        $region48: #{tpu_custom_call.1} parent=43 // pred_fallthru
          _
      $region44: #{tpu_custom_call.1} parent=5 // pred_fallthru
        _
      %p1740 = scmp.le.s32.totalorder 2, %s15
      // Predicated region
      $region49: #{tpu_custom_call.1} parent=5 // pred_check
        %p1741 = pneg %p1740
      $region50: #{tpu_custom_call.1} parent=5 // pred_check_branch
        %1743 = sbr.rel (%p1741) target = $region52
      $region51: #{tpu_custom_call.1} parent=5 // pred_region
        %s1744 = ssub.s32 %s15, 2
        // Predicated region
        $region53: #{tpu_custom_call.1} parent=51 // pred_check
          %p1745 = pneg %p175
        $region54: #{tpu_custom_call.1} parent=51 // pred_check_branch
          %1747 = sbr.rel (%p1745) target = $region56
        $region55: #{tpu_custom_call.1} parent=51 // pred_region
          %s1748 = sand.u32 %s160, 1
          %s1749 = scalar_lea.sflag [#allocation3], %s1748
          %s1750 = sand.u32 %s160, 1
          %s1751 = scalar_lea.vmem [#allocation2], %s1750
          %1752 = dma.done %s1749, 16
        $region56: #{tpu_custom_call.1} parent=51 // pred_fallthru
          _
      $region52: #{tpu_custom_call.1} parent=5 // pred_fallthru
        _
    $region6: #{tpu_custom_call.1} parent=1 // loop_footer
      %s19 = sadd.s32 1, %s15
    $region7: #{tpu_custom_call.1} parent=1 // loop_footer_branch
      %14 = sbr.rel target = $region3
    $region8: #{tpu_custom_call.1} parent=1 // loop_exit
      _
    %1753 = vsyncpa [#allocation3], 1
    %s1754 = scalar_lea.sflag [#allocation3], 1
    %1755 = vsyncpa %s1754, 1

</llo_original>
